<compile_context>
chip_gen: v6e
topology: v6e:2x2x1
jax: 0.10.0
libtpu: 0.0.40
codegen_flags: <defaults>
</compile_context>

<pallas_src>
import functools

import jax
import jax.numpy as jnp
from jax.experimental import pallas as pl
from jax.experimental.pallas import tpu as pltpu


def _norm_reduce_kernel(x_ref, w_ref, b_ref, o_ref):
    # x_ref: (Nt, 4C)  merged-patch rows (input dtype)
    # w_ref: (4C, 2C)  bf16, = diag(gamma) @ W_reduction.T   (affine folded in)
    # b_ref: (1,  2C)  f32,  = beta @ W_reduction.T
    # o_ref: (Nt, 2C)
    x = x_ref[...].astype(jnp.float32)
    mean = jnp.mean(x, axis=-1, keepdims=True)
    centered = x - mean
    var = jnp.mean(centered * centered, axis=-1, keepdims=True)
    xn = (centered * jax.lax.rsqrt(var + 1e-5)).astype(jnp.bfloat16)
    acc = jnp.dot(xn, w_ref[...], preferred_element_type=jnp.float32)
    o_ref[...] = (acc + b_ref[...]).astype(o_ref.dtype)


def _round_up(a, b):
    return (a + b - 1) // b * b


def prepare_down_params(gamma, beta, w_reduction):
    """Fold the LayerNorm affine into the reduction weight, done ONCE.

    gamma, beta: (4C,) LayerNorm params; w_reduction: (2C, 4C) torch Linear weight.
    Returns (w_scaled_bf16 (4C, 2C), bias_f32 (1, 2C)).
    """
    g = gamma.astype(jnp.float32)
    b = beta.astype(jnp.float32)
    w = w_reduction.astype(jnp.float32)
    w_scaled = (g[:, None] * w.T).astype(jnp.bfloat16)     # (4C, 2C)
    bias = (b @ w.T).reshape(1, -1).astype(jnp.float32)    # (1, 2C)
    return w_scaled, bias


@functools.partial(jax.jit, static_argnames=("size",))
def down_forward(x, w_scaled, bias, *, size):
    """Forward pass of Down/PatchMerging.

    x:        (B, H*W, C) with H = W = size
    w_scaled: (4C, 2C) bf16 (from prepare_down_params)
    bias:     (1, 2C)  f32  (from prepare_down_params)
    returns:  (B, (H/2)*(W/2), 2C)
    """
    H = W = size
    B, L, C = x.shape
    assert L == H * W, "input feature has wrong size"
    assert H % 2 == 0 and W % 2 == 0
    C4, C2 = 4 * C, 2 * C

    # --- glue: 2x2 patch-merge gather (fused into the kernel input read) ---
    xv = x.reshape(B, H // 2, 2, W // 2, 2, C)
    x0 = xv[:, :, 0, :, 0, :]   # rows even, cols even
    x1 = xv[:, :, 1, :, 0, :]   # rows odd,  cols even
    x2 = xv[:, :, 0, :, 1, :]   # rows even, cols odd
    x3 = xv[:, :, 1, :, 1, :]   # rows odd,  cols odd
    xm = jnp.concatenate([x0, x1, x2, x3], axis=-1)        # (B, H/2, W/2, 4C)
    N = B * (H // 2) * (W // 2)
    xm = xm.reshape(N, C4)

    # --- tiling: 128/256-aligned row tiles, padded grid (no whole-array fallback)
    Nt = min(512, _round_up(N, 128))
    N_pad = _round_up(N, Nt)
    if N_pad != N:
        xm = jnp.pad(xm, ((0, N_pad - N), (0, 0)))
    grid = (N_pad // Nt,)

    itemsize = x.dtype.itemsize
    vmem_need = (2 * Nt * C4 * itemsize        # double-buffered input tiles
                 + 2 * Nt * C2 * itemsize      # double-buffered output tiles
                 + 2 * C4 * C2 * 2             # bf16 weight (resident)
                 + 2 * C2 * 4)                 # bias
    vmem_limit = int(min(2 * vmem_need + (4 << 20), 64 << 20))

    cost = pl.CostEstimate(
        flops=2 * N * C4 * C2 + 8 * N * C4,
        transcendentals=N,
        bytes_accessed=N * C4 * itemsize + N * C2 * itemsize
        + C4 * C2 * 2 + C2 * 4,
    )

    out = pl.pallas_call(
        _norm_reduce_kernel,
        out_shape=jax.ShapeDtypeStruct((N_pad, C2), x.dtype),
        grid_spec=pltpu.PrefetchScalarGridSpec(
            num_scalar_prefetch=0,
            grid=grid,
            in_specs=[
                pl.BlockSpec((Nt, C4), lambda i: (i, 0)),
                pl.BlockSpec((C4, C2), lambda i: (0, 0)),
                pl.BlockSpec((1, C2), lambda i: (0, 0)),
            ],
            out_specs=pl.BlockSpec((Nt, C2), lambda i: (i, 0)),
        ),
        compiler_params=pltpu.CompilerParams(
            dimension_semantics=("parallel",),
            vmem_limit_bytes=vmem_limit,
            allow_input_fusion=[True, False, False],
        ),
        cost_estimate=cost,
    )(xm, w_scaled, bias)

    return out[:N].reshape(B, (H // 2) * (W // 2), C2)


if __name__ == "__main__":
    # Small shapes consistent with the module; dim=64 so 2*dim = 128 output
    # lanes (lane-dense stores).  x: (2, 16*16, 64).
    B, size, dim = 2, 16, 64
    key = jax.random.PRNGKey(0)
    kx, kw = jax.random.split(key)

    x = jax.random.normal(kx, (B, size * size, dim), dtype=jnp.float32)

    # torch defaults: LN weight=1, bias=0; Linear weight uniform, bias=False.
    gamma = jnp.ones((4 * dim,), dtype=jnp.float32)
    beta = jnp.zeros((4 * dim,), dtype=jnp.float32)
    bound = float(1.0 / (4.0 * dim) ** 0.5)
    w_reduction = jax.random.uniform(
        kw, (2 * dim, 4 * dim), dtype=jnp.float32, minval=-bound, maxval=bound)

    w_scaled, bias = prepare_down_params(gamma, beta, w_reduction)
    out = down_forward(x, w_scaled, bias, size=size)
    jax.block_until_ready(out)

    # --- references ---
    xv = x.reshape(B, size, size, dim)
    xm = jnp.concatenate(
        [xv[:, 0::2, 0::2, :], xv[:, 1::2, 0::2, :],
         xv[:, 0::2, 1::2, :], xv[:, 1::2, 1::2, :]], axis=-1
    ).reshape(B, -1, 4 * dim)
    mu = jnp.mean(xm, axis=-1, keepdims=True)
    var = jnp.mean((xm - mu) ** 2, axis=-1, keepdims=True)
    xn = (xm - mu) * jax.lax.rsqrt(var + 1e-5)

    # exact module semantics (f32)
    ref_exact = (xn * gamma + beta) @ w_reduction.T
    # same bf16 MXU quantization as the kernel (tight check)
    ref_q = (xn.astype(jnp.bfloat16).astype(jnp.float32)
             @ w_scaled.astype(jnp.float32)) + bias[0]

    assert out.shape == (B, (size // 2) * (size // 2), 2 * dim)
    assert jnp.allclose(out, ref_q, atol=5e-3, rtol=5e-3)
    assert jnp.allclose(out, ref_exact, atol=5e-2, rtol=5e-2)

    print("KERNEL_OK")
</pallas_src>

<mosaic_0001>
module attributes {stable_mosaic.version = 11 : i64} {
  func.func @_norm_reduce_kernel(%arg0: i32, %arg1: memref<128x256xf32, #tpu.memory_space<vmem>>, %arg2: memref<256x128xbf16, #tpu.memory_space<vmem>>, %arg3: memref<1x128xf32, #tpu.memory_space<vmem>>, %arg4: memref<128x128xf32, #tpu.memory_space<vmem>>) attributes {dimension_semantics = [#tpu.dimension_semantics<parallel>], iteration_bounds = array<i64: 1>, scalar_prefetch = 0 : i64, scratch_operands = 0 : i64, tpu.core_type = #tpu.core_type<tc>, window_params = [{transform_indices = @transform_0, window_bounds = array<i64: 128, 256>}, {pipeline_mode = #tpu.pipeline_mode<synchronous>, transform_indices = @transform_1, window_bounds = array<i64: 256, 128>}, {pipeline_mode = #tpu.pipeline_mode<synchronous>, transform_indices = @transform_2, window_bounds = array<i64: 1, 128>}, {transform_indices = @transform_3, window_bounds = array<i64: 128, 128>}]} {
    %c0 = arith.constant 0 : index
    %c0_0 = arith.constant 0 : index
    %0 = vector.load %arg1[%c0, %c0_0] : memref<128x256xf32, #tpu.memory_space<vmem>>, vector<128x256xf32>
    %cst = arith.constant dense<0.000000e+00> : vector<128xf32>
    %1 = vector.multi_reduction <add>, %0, %cst [1] : vector<128x256xf32> to vector<128xf32>
    %2 = vector.shape_cast %1 : vector<128xf32> to vector<128x1xf32>
    %cst_1 = arith.constant 2.560000e+02 : f32
    %3 = vector.broadcast %cst_1 : f32 to vector<128x1xf32>
    %4 = arith.divf %2, %3 : vector<128x1xf32>
    %5 = vector.broadcast %4 : vector<128x1xf32> to vector<128x256xf32>
    %6 = arith.subf %0, %5 : vector<128x256xf32>
    %7 = arith.mulf %6, %6 : vector<128x256xf32>
    %cst_2 = arith.constant dense<0.000000e+00> : vector<128xf32>
    %8 = vector.multi_reduction <add>, %7, %cst_2 [1] : vector<128x256xf32> to vector<128xf32>
    %9 = vector.shape_cast %8 : vector<128xf32> to vector<128x1xf32>
    %cst_3 = arith.constant 2.560000e+02 : f32
    %10 = vector.broadcast %cst_3 : f32 to vector<128x1xf32>
    %11 = arith.divf %9, %10 : vector<128x1xf32>
    %cst_4 = arith.constant 9.99999974E-6 : f32
    %12 = vector.broadcast %cst_4 : f32 to vector<128x1xf32>
    %13 = arith.addf %11, %12 : vector<128x1xf32>
    %14 = math.rsqrt %13 : vector<128x1xf32>
    %15 = vector.broadcast %14 : vector<128x1xf32> to vector<128x256xf32>
    %16 = arith.mulf %6, %15 : vector<128x256xf32>
    %17 = arith.truncf %16 : vector<128x256xf32> to vector<128x256xbf16>
    %c0_5 = arith.constant 0 : index
    %c0_6 = arith.constant 0 : index
    %18 = vector.load %arg2[%c0_5, %c0_6] : memref<256x128xbf16, #tpu.memory_space<vmem>>, vector<256x128xbf16>
    %cst_7 = arith.constant dense<0.000000e+00> : vector<128x128xf32>
    %19 = tpu.matmul %17, %18, %cst_7 {dimension_numbers = #tpu.dot_dimension_numbers<[1], [0], [0], [1], [0, 0, 1, 1], [], []>} : vector<128x256xbf16>, vector<256x128xbf16>, vector<128x128xf32> -> vector<128x128xf32>
    %c0_8 = arith.constant 0 : index
    %c0_9 = arith.constant 0 : index
    %20 = vector.load %arg3[%c0_8, %c0_9] : memref<1x128xf32, #tpu.memory_space<vmem>>, vector<1x128xf32>
    %21 = vector.broadcast %20 : vector<1x128xf32> to vector<128x128xf32>
    %22 = arith.addf %19, %21 : vector<128x128xf32>
    %c0_10 = arith.constant 0 : index
    %c0_11 = arith.constant 0 : index
    %23 = vector.load %arg4[%c0_10, %c0_11] : memref<128x128xf32, #tpu.memory_space<vmem>>, vector<128x128xf32>
    tpu.vector_store %arg4[%c0_10, %c0_11], %22 {strides = array<i32>} : memref<128x128xf32, #tpu.memory_space<vmem>>, vector<128x128xf32>,
    return
  }
  func.func @transform_0(%arg0: i32) -> (i32, i32) {
    %c0_i32 = arith.constant 0 : i32
    %c0_i32_0 = arith.constant 0 : i32
    return %arg0, %c0_i32 : i32, i32
  }
  func.func @transform_1(%arg0: i32) -> (i32, i32) {
    %c0_i32 = arith.constant 0 : i32
    %c0_i32_0 = arith.constant 0 : i32
    %c0_i32_1 = arith.constant 0 : i32
    return %c0_i32, %c0_i32_0 : i32, i32
  }
  func.func @transform_2(%arg0: i32) -> (i32, i32) {
    %c0_i32 = arith.constant 0 : i32
    %c0_i32_0 = arith.constant 0 : i32
    %c0_i32_1 = arith.constant 0 : i32
    return %c0_i32, %c0_i32_0 : i32, i32
  }
  func.func @transform_3(%arg0: i32) -> (i32, i32) {
    %c0_i32 = arith.constant 0 : i32
    %c0_i32_0 = arith.constant 0 : i32
    return %arg0, %c0_i32 : i32, i32
  }
}

</mosaic_0001>

<llo_original>
// kernel: down_forward.2
$region0: #{down_forward.2}
  #allocation0 [shape = 'u32[]', space=smem, size = 0x4, offset = 0x4, fixed_abs, tag = 'smem constant byte address 0x4 - core index']
  #allocation1 [shape = 'u32[144,128]{1,0:T(1,128)}', space=vmem, size = 0x12000, scoped, tag = 'internal scratch']
  #allocation2 [shape = 'u32[2048]{0}', space=vmem, size = 0x2000, scoped, tag = 'scoped memory for down_forward.2']
  #allocation3 [shape = 'u32[2048]{0}', space=vmem, size = 0x2000, scoped, tag = 'scoped memory for down_forward.2']
  #allocation4 [shape = 'u32[2048]{0}', space=vmem, size = 0x2000, scoped, tag = 'scoped memory for down_forward.2']
  #allocation5 [shape = 'u32[2048]{0}', space=vmem, size = 0x2000, scoped, tag = 'scoped memory for down_forward.2']
  #allocation6 [shape = 'u32[2048]{0}', space=vmem, size = 0x2000, scoped, tag = 'scoped memory for down_forward.2']
  #allocation7 [shape = 'u32[2048]{0}', space=vmem, size = 0x2000, scoped, tag = 'scoped memory for down_forward.2']
  #allocation8 [shape = 'u32[2048]{0}', space=vmem, size = 0x2000, scoped, tag = 'scoped memory for down_forward.2']
  #allocation9 [shape = 'u32[2048]{0}', space=vmem, size = 0x2000, scoped, tag = 'scoped memory for down_forward.2']
  #allocation10 [shape = 'u32[2048]{0}', space=vmem, size = 0x2000, scoped, tag = 'scoped memory for down_forward.2']
  #allocation11 [shape = 'u32[2048]{0}', space=vmem, size = 0x2000, scoped, tag = 'scoped memory for down_forward.2']
  #allocation12 [shape = 'u32[2048]{0}', space=vmem, size = 0x2000, scoped, tag = 'scoped memory for down_forward.2']
  #allocation13 [shape = 'u32[2048]{0}', space=vmem, size = 0x2000, scoped, tag = 'scoped memory for down_forward.2']
  #allocation14 [shape = 'u32[2048]{0}', space=vmem, size = 0x2000, scoped, tag = 'scoped memory for down_forward.2']
  #allocation15 [shape = 'u32[2048]{0}', space=vmem, size = 0x2000, scoped, tag = 'scoped memory for down_forward.2']
  #allocation16 [shape = 'u32[2048]{0}', space=vmem, size = 0x2000, scoped, tag = 'scoped memory for down_forward.2']
  #allocation17 [shape = 'u32[2048]{0}', space=vmem, size = 0x2000, scoped, tag = 'scoped memory for down_forward.2']
  #allocation18 [shape = 'u32[2048]{0}', space=vmem, size = 0x2000, scoped, tag = 'scoped memory for down_forward.2']
  #allocation19 [shape = 'u32[2048]{0}', space=vmem, size = 0x2000, scoped, tag = 'scoped memory for down_forward.2']
  #allocation20 [shape = 'u32[2048]{0}', space=vmem, size = 0x2000, scoped, tag = 'scoped memory for down_forward.2']
  #allocation21 [shape = 'u32[2048]{0}', space=vmem, size = 0x2000, scoped, tag = 'scoped memory for down_forward.2']
  %s0 = inlined_call_operand.vmem [shape: bf16[256,128], index: 0, kind: input, shape index: {}]
  %s1 = inlined_call_operand.vmem [shape: f32[1,128], index: 1, kind: input, shape index: {}]
  %s2 = inlined_call_operand.vmem [shape: f32[128,64], index: 2, kind: input, shape index: {}]
  %s3 = inlined_call_operand.<no memory space> [shape: f32[], index: 3, kind: input, shape index: {}]
  %s4 = inlined_call_operand.vmem [shape: f32[128,64], index: 4, kind: input, shape index: {}]
  %s5 = inlined_call_operand.vmem [shape: f32[128,64], index: 5, kind: input, shape index: {}]
  %s6 = inlined_call_operand.vmem [shape: f32[128,64], index: 6, kind: input, shape index: {}]
  %s7 = inlined_call_operand.hbm [shape: f32[128,128], index: 7, kind: output, shape index: {}]
  %s8 = sld [smem:[#allocation0]]
  $region34: #{down_forward.2} parent=0
    _
  %s10 = ssub.s32 1, %s8
  %s11 = scalar_select 0, %s10, %s8
  %v12 = vstv %s3
  %v13 = vstv %s3
  %v14 = vstv %s3
  %v15 = vstv %s3
  $region1: #{down_forward.2} parent=0
    #allocation22 [shape = 'u8[65536]{0}', space=vmem, size = 0x10000, scoped, tag = 'output window, operand 0, single buffered']
    #allocation23 [shape = 's32[1]{0}', space=sflag, size = 0x4, scoped, tag = 'scoped memory for down_forward.2']
    #allocation24 [shape = 'u8[131072]{0}', space=vmem, size = 0x20000, dematerialized = true, scoped, tag = 'FusionAdapter Buffer %fusion.1 = f32[128,256]{1,0:T(8,128)} fusion(%param_2.3, %param_3.2, %param_4.2, %param_5.3, %param_6.2), kind=kLoop, calls=%fused_computation.1.clone, metadata={op_name="jit(down_forward)/concatenate" stack_frame_id=12}']
    %16 = vsyncpa [#allocation23], 0
    // Predicated region
    $region2: #{down_forward.2} parent=1 // pred_check
      _
    $region3: #{down_forward.2} parent=1 // pred_check_branch
      %18 = sbr.rel (0) target = $region5
    $region4: #{down_forward.2} parent=1 // pred_region
      %s20 = ssub.s32 1, 0
      %s21 = smul.u32 2048, %s20
      %p22 = scmp.lt.s32.totalorder 0, 0
      %s23 = scalar_select %p22, 0, 0
      %s24 = smul.addr %s23, 8
      %s25 = scalar_lea.vmem %s2, %s24
      %s27 = ssub.s32 1, 0
      %s28 = smul.u32 2048, %s27
    $region5: #{down_forward.2} parent=1 // pred_fallthru
      _
    // Predicated region
    $region6: #{down_forward.2} parent=1 // pred_check
      _
    $region7: #{down_forward.2} parent=1 // pred_check_branch
      %30 = sbr.rel (0) target = $region9
    $region8: #{down_forward.2} parent=1 // pred_region
      %s32 = ssub.s32 1, 0
      %s33 = smul.u32 2048, %s32
      %p34 = scmp.lt.s32.totalorder 0, 0
      %s35 = scalar_select %p34, 0, 0
      %s36 = smul.addr %s35, 8
      %s37 = scalar_lea.vmem %s4, %s36
      %s39 = ssub.s32 1, 0
      %s40 = smul.u32 2048, %s39
    $region9: #{down_forward.2} parent=1 // pred_fallthru
      _
    // Predicated region
    $region10: #{down_forward.2} parent=1 // pred_check
      _
    $region11: #{down_forward.2} parent=1 // pred_check_branch
      %42 = sbr.rel (0) target = $region13
    $region12: #{down_forward.2} parent=1 // pred_region
      %s44 = ssub.s32 1, 0
      %s45 = smul.u32 2048, %s44
      %p46 = scmp.lt.s32.totalorder 0, 0
      %s47 = scalar_select %p46, 0, 0
      %s48 = smul.addr %s47, 8
      %s49 = scalar_lea.vmem %s5, %s48
      %s51 = ssub.s32 1, 0
      %s52 = smul.u32 2048, %s51
    $region13: #{down_forward.2} parent=1 // pred_fallthru
      _
    // Predicated region
    $region14: #{down_forward.2} parent=1 // pred_check
      _
    $region15: #{down_forward.2} parent=1 // pred_check_branch
      %54 = sbr.rel (0) target = $region17
    $region16: #{down_forward.2} parent=1 // pred_region
      _
    $region17: #{down_forward.2} parent=1 // pred_fallthru
      _
    // Predicated region
    $region18: #{down_forward.2} parent=1 // pred_check
      _
    $region19: #{down_forward.2} parent=1 // pred_check_branch
      %56 = sbr.rel (0) target = $region21
    $region20: #{down_forward.2} parent=1 // pred_region
      _
    $region21: #{down_forward.2} parent=1 // pred_fallthru
      _
    // Predicated region
    $region22: #{down_forward.2} parent=1 // pred_check
      _
    $region23: #{down_forward.2} parent=1 // pred_check_branch
      %58 = sbr.rel (0) target = $region25
    $region24: #{down_forward.2} parent=1 // pred_region
      _
    $region25: #{down_forward.2} parent=1 // pred_fallthru
      _
    %s60 = ssub.s32 1, 0
    %s61 = smul.u32 2048, %s60
    %p62 = scmp.lt.s32.totalorder 0, 0
    %s63 = scalar_select %p62, 0, 0
    %s64 = smul.addr %s63, 8
    %s65 = scalar_lea.vmem %s2, %s64
    %s67 = ssub.s32 1, 0
    %s68 = smul.u32 2048, %s67
    %p69 = scmp.lt.s32.totalorder 0, 0
    %s70 = scalar_select %p69, 0, 0
    %s71 = smul.addr %s70, 8
    %s72 = scalar_lea.vmem %s4, %s71
    %s74 = ssub.s32 1, 0
    %s75 = smul.u32 2048, %s74
    %p76 = scmp.lt.s32.totalorder 0, 0
    %s77 = scalar_select %p76, 0, 0
    %s78 = smul.addr %s77, 8
    %s79 = scalar_lea.vmem %s5, %s78
    %s81 = ssub.s32 1, 0
    %s82 = smul.u32 2048, %s81
    %p83 = scmp.lt.s32.totalorder 0, 0
    %s84 = scalar_select %p83, 0, 0
    %s85 = smul.addr %s84, 8
    %s86 = scalar_lea.vmem %s2, %s85
    %s88 = ssub.s32 1, 0
    %s89 = smul.u32 2048, %s88
    %s91 = ssub.s32 1, 0
    %s92 = smul.u32 2048, %s91
    %p93 = scmp.lt.s32.totalorder 0, 0
    %s94 = scalar_select %p93, 0, 0
    %s95 = smul.addr %s94, 8
    %s96 = scalar_lea.vmem %s4, %s95
    %s98 = ssub.s32 1, 0
    %s99 = smul.u32 2048, %s98
    %s101 = ssub.s32 1, 0
    %s102 = smul.u32 2048, %s101
    %p103 = scmp.lt.s32.totalorder 0, 0
    %s104 = scalar_select %p103, 0, 0
    %s105 = smul.addr %s104, 8
    %s106 = scalar_lea.vmem %s5, %s105
    %s108 = ssub.s32 1, 0
    %s109 = smul.u32 2048, %s108
    %s110 = ssub.s32 0, 0
    %p111 = scmp.lt.s32.totalorder %s110, 0
    %s112 = scalar_select %p111, 0, 255
    %v113 = vld [vmem:[%s86] sm:%s112]
    %s114 = ssub.s32 0, 0
    %p115 = scmp.lt.s32.totalorder %s114, 0
    %s116 = scalar_select %p115, 0, 255
    %v117 = vld [vmem:[%s96] sm:%s116]
    %s118 = ssub.s32 0, 0
    %p119 = scmp.lt.s32.totalorder %s118, 0
    %s120 = scalar_select %p119, 0, 255
    %v121 = vld [vmem:[%s106] sm:%s120]
    %v122 = vlaneseq
    %v123 = vand.u32 %v122, 127
    %v124 = vadd.s32 %v123, 128
    %vm125 = vcmp.lt.s32.totalorder %v124, 192
    %v126 = vsel %vm125, %v121, %v14
    %v127 = vlaneseq
    %v128 = vand.u32 %v127, 127
    %vm129 = vcmp.lt.s32.totalorder %v128, 64
    %v130 = vsel %vm129, %v126, %v14
    %131 = vrot.lane.b32.xlu0 %v130, 64
    %v132 = vpop.permute.xlu0 %131
    %v133 = vld [vmem:[%s6] sm:$0xff]
    %v134 = vlaneseq
    %v135 = vand.u32 %v134, 127
    %vm137 = vcmp.lt.s32.totalorder %v135, 64
    %v138 = vsel %vm137, %v133, %v15
    %139 = xla_tuple %v138, %v132
    %140 = xla_tuple %139
    %v141 = vmax.f32 %v138, %v132
    %142 = xla_tuple %v141
    %143 = xla_tuple %v141, %v13
    %144 = xla_tuple %143
    %v145 = vmax.f32 %v141, %v13
    %146 = xla_tuple %v145
    %147 = xla_tuple %v145, %v12
    %148 = xla_tuple %147
    %v149 = vmax.f32 %v145, %v12
    %150 = xla_tuple %v149
    %s152 = ssub.s32 256, 1
    %153 = vst [vmem:[#allocation24] sm:%s152] %v149
    %v154 = vlaneseq
    %v155 = vand.u32 %v154, 127
    %v156 = vadd.s32 %v155, 256
    %vm157 = vcmp.lt.s32.totalorder %v156, 320
    %v158 = vsel %vm157, %v113, %v12
    %v159 = vlaneseq
    %v160 = vand.u32 %v159, 127
    %vm161 = vcmp.lt.s32.totalorder %v160, 64
    %v162 = vsel %vm161, %v158, %v12
    %163 = vrot.lane.b32.xlu0 %v162, 64
    %v164 = vpop.permute.xlu0 %163
    %v165 = vlaneseq
    %v166 = vand.u32 %v165, 127
    %v167 = vadd.s32 %v166, 128
    %vm168 = vcmp.lt.s32.totalorder %v167, 192
    %v169 = vsel %vm168, %v117, %v13
    %v170 = vlaneseq
    %v171 = vand.u32 %v170, 127
    %vm172 = vcmp.lt.s32.totalorder %v171, 64
    %v173 = vsel %vm172, %v14, %v126
    %174 = vrot.lane.b32.xlu0 %v173, 64
    %v175 = vpop.permute.xlu0 %174
    %176 = xla_tuple %v15, %v175
    %177 = xla_tuple %176
    %v178 = vmax.f32 %v15, %v175
    %179 = xla_tuple %v178
    %180 = xla_tuple %v178, %v169
    %181 = xla_tuple %180
    %v182 = vmax.f32 %v178, %v169
    %183 = xla_tuple %v182
    %184 = xla_tuple %v182, %v164
    %185 = xla_tuple %184
    %v186 = vmax.f32 %v182, %v164
    %187 = xla_tuple %v186
    %s188 = scalar_lea.vmem [#allocation24], 8
    %s190 = ssub.s32 256, 1
    %191 = vst [vmem:[%s188] sm:%s190] %v186
    %s192 = scalar_lea.vmem %s86, 8
    %s193 = ssub.s32 0, 0
    %p194 = scmp.lt.s32.totalorder %s193, 0
    %s195 = scalar_select %p194, 0, 255
    %v196 = vld [vmem:[%s192] sm:%s195]
    %s197 = scalar_lea.vmem %s86, 8
    %s198 = scalar_lea.vmem %s96, 8
    %s199 = ssub.s32 0, 0
    %p200 = scmp.lt.s32.totalorder %s199, 0
    %s201 = scalar_select %p200, 0, 255
    %v202 = vld [vmem:[%s198] sm:%s201]
    %s203 = scalar_lea.vmem %s106, 8
    %s204 = ssub.s32 0, 0
    %p205 = scmp.lt.s32.totalorder %s204, 0
    %s206 = scalar_select %p205, 0, 255
    %v207 = vld [vmem:[%s203] sm:%s206]
    %s208 = scalar_lea.vmem %s106, 8
    %v209 = vlaneseq
    %v210 = vand.u32 %v209, 127
    %v211 = vadd.s32 %v210, 128
    %vm212 = vcmp.lt.s32.totalorder %v211, 192
    %v213 = vsel %vm212, %v207, %v14
    %v214 = vlaneseq
    %v215 = vand.u32 %v214, 127
    %vm216 = vcmp.lt.s32.totalorder %v215, 64
    %v217 = vsel %vm216, %v213, %v14
    %218 = vrot.lane.b32.xlu0 %v217, 64
    %v219 = vpop.permute.xlu0 %218
    %s220 = scalar_lea.vmem %s6, 8
    %v221 = vld [vmem:[%s220] sm:$0xff]
    %v222 = vlaneseq
    %v223 = vand.u32 %v222, 127
    %vm225 = vcmp.lt.s32.totalorder %v223, 64
    %v226 = vsel %vm225, %v221, %v15
    %227 = xla_tuple %v226, %v219
    %228 = xla_tuple %227
    %v229 = vmax.f32 %v226, %v219
    %230 = xla_tuple %v229
    %231 = xla_tuple %v229, %v13
    %232 = xla_tuple %231
    %v233 = vmax.f32 %v229, %v13
    %234 = xla_tuple %v233
    %235 = xla_tuple %v233, %v12
    %236 = xla_tuple %235
    %v237 = vmax.f32 %v233, %v12
    %238 = xla_tuple %v237
    %s239 = scalar_lea.vmem [#allocation24], 16
    %s241 = ssub.s32 256, 1
    %242 = vst [vmem:[%s239] sm:%s241] %v237
    %s243 = scalar_lea.vmem %s86, 8
    %v244 = vlaneseq
    %v245 = vand.u32 %v244, 127
    %v246 = vadd.s32 %v245, 256
    %vm247 = vcmp.lt.s32.totalorder %v246, 320
    %v248 = vsel %vm247, %v196, %v12
    %v249 = vlaneseq
    %v250 = vand.u32 %v249, 127
    %vm251 = vcmp.lt.s32.totalorder %v250, 64
    %v252 = vsel %vm251, %v248, %v12
    %253 = vrot.lane.b32.xlu0 %v252, 64
    %v254 = vpop.permute.xlu0 %253
    %s255 = scalar_lea.vmem %s96, 8
    %v256 = vlaneseq
    %v257 = vand.u32 %v256, 127
    %v258 = vadd.s32 %v257, 128
    %vm259 = vcmp.lt.s32.totalorder %v258, 192
    %v260 = vsel %vm259, %v202, %v13
    %s261 = scalar_lea.vmem %s106, 8
    %v262 = vlaneseq
    %v263 = vand.u32 %v262, 127
    %vm264 = vcmp.lt.s32.totalorder %v263, 64
    %v265 = vsel %vm264, %v14, %v213
    %266 = vrot.lane.b32.xlu0 %v265, 64
    %v267 = vpop.permute.xlu0 %266
    %268 = xla_tuple %v15, %v267
    %269 = xla_tuple %268
    %v270 = vmax.f32 %v15, %v267
    %271 = xla_tuple %v270
    %272 = xla_tuple %v270, %v260
    %273 = xla_tuple %272
    %v274 = vmax.f32 %v270, %v260
    %275 = xla_tuple %v274
    %276 = xla_tuple %v274, %v254
    %277 = xla_tuple %276
    %v278 = vmax.f32 %v274, %v254
    %279 = xla_tuple %v278
    %s280 = scalar_lea.vmem [#allocation24], 24
    %s282 = ssub.s32 256, 1
    %283 = vst [vmem:[%s280] sm:%s282] %v278
    %s284 = scalar_lea.vmem %s86, 16
    %s285 = ssub.s32 0, 0
    %p286 = scmp.lt.s32.totalorder %s285, 0
    %s287 = scalar_select %p286, 0, 255
    %v288 = vld [vmem:[%s284] sm:%s287]
    %s289 = scalar_lea.vmem %s86, 16
    %s290 = scalar_lea.vmem %s96, 16
    %s291 = ssub.s32 0, 0
    %p292 = scmp.lt.s32.totalorder %s291, 0
    %s293 = scalar_select %p292, 0, 255
    %v294 = vld [vmem:[%s290] sm:%s293]
    %s295 = scalar_lea.vmem %s106, 16
    %s296 = ssub.s32 0, 0
    %p297 = scmp.lt.s32.totalorder %s296, 0
    %s298 = scalar_select %p297, 0, 255
    %v299 = vld [vmem:[%s295] sm:%s298]
    %s300 = scalar_lea.vmem %s106, 16
    %v301 = vlaneseq
    %v302 = vand.u32 %v301, 127
    %v303 = vadd.s32 %v302, 128
    %vm304 = vcmp.lt.s32.totalorder %v303, 192
    %v305 = vsel %vm304, %v299, %v14
    %v306 = vlaneseq
    %v307 = vand.u32 %v306, 127
    %vm308 = vcmp.lt.s32.totalorder %v307, 64
    %v309 = vsel %vm308, %v305, %v14
    %310 = vrot.lane.b32.xlu0 %v309, 64
    %v311 = vpop.permute.xlu0 %310
    %s312 = scalar_lea.vmem %s6, 16
    %v313 = vld [vmem:[%s312] sm:$0xff]
    %v314 = vlaneseq
    %v315 = vand.u32 %v314, 127
    %vm317 = vcmp.lt.s32.totalorder %v315, 64
    %v318 = vsel %vm317, %v313, %v15
    %319 = xla_tuple %v318, %v311
    %320 = xla_tuple %319
    %v321 = vmax.f32 %v318, %v311
    %322 = xla_tuple %v321
    %323 = xla_tuple %v321, %v13
    %324 = xla_tuple %323
    %v325 = vmax.f32 %v321, %v13
    %326 = xla_tuple %v325
    %327 = xla_tuple %v325, %v12
    %328 = xla_tuple %327
    %v329 = vmax.f32 %v325, %v12
    %330 = xla_tuple %v329
    %s331 = scalar_lea.vmem [#allocation24], 32
    %s333 = ssub.s32 256, 1
    %334 = vst [vmem:[%s331] sm:%s333] %v329
    %s335 = scalar_lea.vmem %s86, 16
    %v336 = vlaneseq
    %v337 = vand.u32 %v336, 127
    %v338 = vadd.s32 %v337, 256
    %vm339 = vcmp.lt.s32.totalorder %v338, 320
    %v340 = vsel %vm339, %v288, %v12
    %v341 = vlaneseq
    %v342 = vand.u32 %v341, 127
    %vm343 = vcmp.lt.s32.totalorder %v342, 64
    %v344 = vsel %vm343, %v340, %v12
    %345 = vrot.lane.b32.xlu0 %v344, 64
    %v346 = vpop.permute.xlu0 %345
    %s347 = scalar_lea.vmem %s96, 16
    %v348 = vlaneseq
    %v349 = vand.u32 %v348, 127
    %v350 = vadd.s32 %v349, 128
    %vm351 = vcmp.lt.s32.totalorder %v350, 192
    %v352 = vsel %vm351, %v294, %v13
    %s353 = scalar_lea.vmem %s106, 16
    %v354 = vlaneseq
    %v355 = vand.u32 %v354, 127
    %vm356 = vcmp.lt.s32.totalorder %v355, 64
    %v357 = vsel %vm356, %v14, %v305
    %358 = vrot.lane.b32.xlu0 %v357, 64
    %v359 = vpop.permute.xlu0 %358
    %360 = xla_tuple %v15, %v359
    %361 = xla_tuple %360
    %v362 = vmax.f32 %v15, %v359
    %363 = xla_tuple %v362
    %364 = xla_tuple %v362, %v352
    %365 = xla_tuple %364
    %v366 = vmax.f32 %v362, %v352
    %367 = xla_tuple %v366
    %368 = xla_tuple %v366, %v346
    %369 = xla_tuple %368
    %v370 = vmax.f32 %v366, %v346
    %371 = xla_tuple %v370
    %s372 = scalar_lea.vmem [#allocation24], 40
    %s374 = ssub.s32 256, 1
    %375 = vst [vmem:[%s372] sm:%s374] %v370
    %s376 = scalar_lea.vmem %s86, 24
    %s377 = ssub.s32 0, 0
    %p378 = scmp.lt.s32.totalorder %s377, 0
    %s379 = scalar_select %p378, 0, 255
    %v380 = vld [vmem:[%s376] sm:%s379]
    %s381 = scalar_lea.vmem %s86, 24
    %s382 = scalar_lea.vmem %s96, 24
    %s383 = ssub.s32 0, 0
    %p384 = scmp.lt.s32.totalorder %s383, 0
    %s385 = scalar_select %p384, 0, 255
    %v386 = vld [vmem:[%s382] sm:%s385]
    %s387 = scalar_lea.vmem %s106, 24
    %s388 = ssub.s32 0, 0
    %p389 = scmp.lt.s32.totalorder %s388, 0
    %s390 = scalar_select %p389, 0, 255
    %v391 = vld [vmem:[%s387] sm:%s390]
    %s392 = scalar_lea.vmem %s106, 24
    %v393 = vlaneseq
    %v394 = vand.u32 %v393, 127
    %v395 = vadd.s32 %v394, 128
    %vm396 = vcmp.lt.s32.totalorder %v395, 192
    %v397 = vsel %vm396, %v391, %v14
    %v398 = vlaneseq
    %v399 = vand.u32 %v398, 127
    %vm400 = vcmp.lt.s32.totalorder %v399, 64
    %v401 = vsel %vm400, %v397, %v14
    %402 = vrot.lane.b32.xlu0 %v401, 64
    %v403 = vpop.permute.xlu0 %402
    %s404 = scalar_lea.vmem %s6, 24
    %v405 = vld [vmem:[%s404] sm:$0xff]
    %v406 = vlaneseq
    %v407 = vand.u32 %v406, 127
    %vm409 = vcmp.lt.s32.totalorder %v407, 64
    %v410 = vsel %vm409, %v405, %v15
    %411 = xla_tuple %v410, %v403
    %412 = xla_tuple %411
    %v413 = vmax.f32 %v410, %v403
    %414 = xla_tuple %v413
    %415 = xla_tuple %v413, %v13
    %416 = xla_tuple %415
    %v417 = vmax.f32 %v413, %v13
    %418 = xla_tuple %v417
    %419 = xla_tuple %v417, %v12
    %420 = xla_tuple %419
    %v421 = vmax.f32 %v417, %v12
    %422 = xla_tuple %v421
    %s423 = scalar_lea.vmem [#allocation24], 48
    %s425 = ssub.s32 256, 1
    %426 = vst [vmem:[%s423] sm:%s425] %v421
    %s427 = scalar_lea.vmem %s86, 24
    %v428 = vlaneseq
    %v429 = vand.u32 %v428, 127
    %v430 = vadd.s32 %v429, 256
    %vm431 = vcmp.lt.s32.totalorder %v430, 320
    %v432 = vsel %vm431, %v380, %v12
    %v433 = vlaneseq
    %v434 = vand.u32 %v433, 127
    %vm435 = vcmp.lt.s32.totalorder %v434, 64
    %v436 = vsel %vm435, %v432, %v12
    %437 = vrot.lane.b32.xlu0 %v436, 64
    %v438 = vpop.permute.xlu0 %437
    %s439 = scalar_lea.vmem %s96, 24
    %v440 = vlaneseq
    %v441 = vand.u32 %v440, 127
    %v442 = vadd.s32 %v441, 128
    %vm443 = vcmp.lt.s32.totalorder %v442, 192
    %v444 = vsel %vm443, %v386, %v13
    %s445 = scalar_lea.vmem %s106, 24
    %v446 = vlaneseq
    %v447 = vand.u32 %v446, 127
    %vm448 = vcmp.lt.s32.totalorder %v447, 64
    %v449 = vsel %vm448, %v14, %v397
    %450 = vrot.lane.b32.xlu0 %v449, 64
    %v451 = vpop.permute.xlu0 %450
    %452 = xla_tuple %v15, %v451
    %453 = xla_tuple %452
    %v454 = vmax.f32 %v15, %v451
    %455 = xla_tuple %v454
    %456 = xla_tuple %v454, %v444
    %457 = xla_tuple %456
    %v458 = vmax.f32 %v454, %v444
    %459 = xla_tuple %v458
    %460 = xla_tuple %v458, %v438
    %461 = xla_tuple %460
    %v462 = vmax.f32 %v458, %v438
    %463 = xla_tuple %v462
    %s464 = scalar_lea.vmem [#allocation24], 56
    %s466 = ssub.s32 256, 1
    %467 = vst [vmem:[%s464] sm:%s466] %v462
    %s468 = scalar_lea.vmem %s86, 32
    %s469 = ssub.s32 0, 0
    %p470 = scmp.lt.s32.totalorder %s469, 0
    %s471 = scalar_select %p470, 0, 255
    %v472 = vld [vmem:[%s468] sm:%s471]
    %s473 = scalar_lea.vmem %s86, 32
    %s474 = scalar_lea.vmem %s96, 32
    %s475 = ssub.s32 0, 0
    %p476 = scmp.lt.s32.totalorder %s475, 0
    %s477 = scalar_select %p476, 0, 255
    %v478 = vld [vmem:[%s474] sm:%s477]
    %s479 = scalar_lea.vmem %s106, 32
    %s480 = ssub.s32 0, 0
    %p481 = scmp.lt.s32.totalorder %s480, 0
    %s482 = scalar_select %p481, 0, 255
    %v483 = vld [vmem:[%s479] sm:%s482]
    %s484 = scalar_lea.vmem %s106, 32
    %v485 = vlaneseq
    %v486 = vand.u32 %v485, 127
    %v487 = vadd.s32 %v486, 128
    %vm488 = vcmp.lt.s32.totalorder %v487, 192
    %v489 = vsel %vm488, %v483, %v14
    %v490 = vlaneseq
    %v491 = vand.u32 %v490, 127
    %vm492 = vcmp.lt.s32.totalorder %v491, 64
    %v493 = vsel %vm492, %v489, %v14
    %494 = vrot.lane.b32.xlu0 %v493, 64
    %v495 = vpop.permute.xlu0 %494
    %s496 = scalar_lea.vmem %s6, 32
    %v497 = vld [vmem:[%s496] sm:$0xff]
    %v498 = vlaneseq
    %v499 = vand.u32 %v498, 127
    %vm501 = vcmp.lt.s32.totalorder %v499, 64
    %v502 = vsel %vm501, %v497, %v15
    %503 = xla_tuple %v502, %v495
    %504 = xla_tuple %503
    %v505 = vmax.f32 %v502, %v495
    %506 = xla_tuple %v505
    %507 = xla_tuple %v505, %v13
    %508 = xla_tuple %507
    %v509 = vmax.f32 %v505, %v13
    %510 = xla_tuple %v509
    %511 = xla_tuple %v509, %v12
    %512 = xla_tuple %511
    %v513 = vmax.f32 %v509, %v12
    %514 = xla_tuple %v513
    %s515 = scalar_lea.vmem [#allocation24], 64
    %s517 = ssub.s32 256, 1
    %518 = vst [vmem:[%s515] sm:%s517] %v513
    %s519 = scalar_lea.vmem %s86, 32
    %v520 = vlaneseq
    %v521 = vand.u32 %v520, 127
    %v522 = vadd.s32 %v521, 256
    %vm523 = vcmp.lt.s32.totalorder %v522, 320
    %v524 = vsel %vm523, %v472, %v12
    %v525 = vlaneseq
    %v526 = vand.u32 %v525, 127
    %vm527 = vcmp.lt.s32.totalorder %v526, 64
    %v528 = vsel %vm527, %v524, %v12
    %529 = vrot.lane.b32.xlu0 %v528, 64
    %v530 = vpop.permute.xlu0 %529
    %s531 = scalar_lea.vmem %s96, 32
    %v532 = vlaneseq
    %v533 = vand.u32 %v532, 127
    %v534 = vadd.s32 %v533, 128
    %vm535 = vcmp.lt.s32.totalorder %v534, 192
    %v536 = vsel %vm535, %v478, %v13
    %s537 = scalar_lea.vmem %s106, 32
    %v538 = vlaneseq
    %v539 = vand.u32 %v538, 127
    %vm540 = vcmp.lt.s32.totalorder %v539, 64
    %v541 = vsel %vm540, %v14, %v489
    %542 = vrot.lane.b32.xlu0 %v541, 64
    %v543 = vpop.permute.xlu0 %542
    %544 = xla_tuple %v15, %v543
    %545 = xla_tuple %544
    %v546 = vmax.f32 %v15, %v543
    %547 = xla_tuple %v546
    %548 = xla_tuple %v546, %v536
    %549 = xla_tuple %548
    %v550 = vmax.f32 %v546, %v536
    %551 = xla_tuple %v550
    %552 = xla_tuple %v550, %v530
    %553 = xla_tuple %552
    %v554 = vmax.f32 %v550, %v530
    %555 = xla_tuple %v554
    %s556 = scalar_lea.vmem [#allocation24], 72
    %s558 = ssub.s32 256, 1
    %559 = vst [vmem:[%s556] sm:%s558] %v554
    %s560 = scalar_lea.vmem %s86, 40
    %s561 = ssub.s32 0, 0
    %p562 = scmp.lt.s32.totalorder %s561, 0
    %s563 = scalar_select %p562, 0, 255
    %v564 = vld [vmem:[%s560] sm:%s563]
    %s565 = scalar_lea.vmem %s86, 40
    %s566 = scalar_lea.vmem %s96, 40
    %s567 = ssub.s32 0, 0
    %p568 = scmp.lt.s32.totalorder %s567, 0
    %s569 = scalar_select %p568, 0, 255
    %v570 = vld [vmem:[%s566] sm:%s569]
    %s571 = scalar_lea.vmem %s106, 40
    %s572 = ssub.s32 0, 0
    %p573 = scmp.lt.s32.totalorder %s572, 0
    %s574 = scalar_select %p573, 0, 255
    %v575 = vld [vmem:[%s571] sm:%s574]
    %s576 = scalar_lea.vmem %s106, 40
    %v577 = vlaneseq
    %v578 = vand.u32 %v577, 127
    %v579 = vadd.s32 %v578, 128
    %vm580 = vcmp.lt.s32.totalorder %v579, 192
    %v581 = vsel %vm580, %v575, %v14
    %v582 = vlaneseq
    %v583 = vand.u32 %v582, 127
    %vm584 = vcmp.lt.s32.totalorder %v583, 64
    %v585 = vsel %vm584, %v581, %v14
    %586 = vrot.lane.b32.xlu0 %v585, 64
    %v587 = vpop.permute.xlu0 %586
    %s588 = scalar_lea.vmem %s6, 40
    %v589 = vld [vmem:[%s588] sm:$0xff]
    %v590 = vlaneseq
    %v591 = vand.u32 %v590, 127
    %vm593 = vcmp.lt.s32.totalorder %v591, 64
    %v594 = vsel %vm593, %v589, %v15
    %595 = xla_tuple %v594, %v587
    %596 = xla_tuple %595
    %v597 = vmax.f32 %v594, %v587
    %598 = xla_tuple %v597
    %599 = xla_tuple %v597, %v13
    %600 = xla_tuple %599
    %v601 = vmax.f32 %v597, %v13
    %602 = xla_tuple %v601
    %603 = xla_tuple %v601, %v12
    %604 = xla_tuple %603
    %v605 = vmax.f32 %v601, %v12
    %606 = xla_tuple %v605
    %s607 = scalar_lea.vmem [#allocation24], 80
    %s609 = ssub.s32 256, 1
    %610 = vst [vmem:[%s607] sm:%s609] %v605
    %s611 = scalar_lea.vmem %s86, 40
    %v612 = vlaneseq
    %v613 = vand.u32 %v612, 127
    %v614 = vadd.s32 %v613, 256
    %vm615 = vcmp.lt.s32.totalorder %v614, 320
    %v616 = vsel %vm615, %v564, %v12
    %v617 = vlaneseq
    %v618 = vand.u32 %v617, 127
    %vm619 = vcmp.lt.s32.totalorder %v618, 64
    %v620 = vsel %vm619, %v616, %v12
    %621 = vrot.lane.b32.xlu0 %v620, 64
    %v622 = vpop.permute.xlu0 %621
    %s623 = scalar_lea.vmem %s96, 40
    %v624 = vlaneseq
    %v625 = vand.u32 %v624, 127
    %v626 = vadd.s32 %v625, 128
    %vm627 = vcmp.lt.s32.totalorder %v626, 192
    %v628 = vsel %vm627, %v570, %v13
    %s629 = scalar_lea.vmem %s106, 40
    %v630 = vlaneseq
    %v631 = vand.u32 %v630, 127
    %vm632 = vcmp.lt.s32.totalorder %v631, 64
    %v633 = vsel %vm632, %v14, %v581
    %634 = vrot.lane.b32.xlu0 %v633, 64
    %v635 = vpop.permute.xlu0 %634
    %636 = xla_tuple %v15, %v635
    %637 = xla_tuple %636
    %v638 = vmax.f32 %v15, %v635
    %639 = xla_tuple %v638
    %640 = xla_tuple %v638, %v628
    %641 = xla_tuple %640
    %v642 = vmax.f32 %v638, %v628
    %643 = xla_tuple %v642
    %644 = xla_tuple %v642, %v622
    %645 = xla_tuple %644
    %v646 = vmax.f32 %v642, %v622
    %647 = xla_tuple %v646
    %s648 = scalar_lea.vmem [#allocation24], 88
    %s650 = ssub.s32 256, 1
    %651 = vst [vmem:[%s648] sm:%s650] %v646
    %s652 = scalar_lea.vmem %s86, 48
    %s653 = ssub.s32 0, 0
    %p654 = scmp.lt.s32.totalorder %s653, 0
    %s655 = scalar_select %p654, 0, 255
    %v656 = vld [vmem:[%s652] sm:%s655]
    %s657 = scalar_lea.vmem %s86, 48
    %s658 = scalar_lea.vmem %s96, 48
    %s659 = ssub.s32 0, 0
    %p660 = scmp.lt.s32.totalorder %s659, 0
    %s661 = scalar_select %p660, 0, 255
    %v662 = vld [vmem:[%s658] sm:%s661]
    %s663 = scalar_lea.vmem %s106, 48
    %s664 = ssub.s32 0, 0
    %p665 = scmp.lt.s32.totalorder %s664, 0
    %s666 = scalar_select %p665, 0, 255
    %v667 = vld [vmem:[%s663] sm:%s666]
    %s668 = scalar_lea.vmem %s106, 48
    %v669 = vlaneseq
    %v670 = vand.u32 %v669, 127
    %v671 = vadd.s32 %v670, 128
    %vm672 = vcmp.lt.s32.totalorder %v671, 192
    %v673 = vsel %vm672, %v667, %v14
    %v674 = vlaneseq
    %v675 = vand.u32 %v674, 127
    %vm676 = vcmp.lt.s32.totalorder %v675, 64
    %v677 = vsel %vm676, %v673, %v14
    %678 = vrot.lane.b32.xlu0 %v677, 64
    %v679 = vpop.permute.xlu0 %678
    %s680 = scalar_lea.vmem %s6, 48
    %v681 = vld [vmem:[%s680] sm:$0xff]
    %v682 = vlaneseq
    %v683 = vand.u32 %v682, 127
    %vm685 = vcmp.lt.s32.totalorder %v683, 64
    %v686 = vsel %vm685, %v681, %v15
    %687 = xla_tuple %v686, %v679
    %688 = xla_tuple %687
    %v689 = vmax.f32 %v686, %v679
    %690 = xla_tuple %v689
    %691 = xla_tuple %v689, %v13
    %692 = xla_tuple %691
    %v693 = vmax.f32 %v689, %v13
    %694 = xla_tuple %v693
    %695 = xla_tuple %v693, %v12
    %696 = xla_tuple %695
    %v697 = vmax.f32 %v693, %v12
    %698 = xla_tuple %v697
    %s699 = scalar_lea.vmem [#allocation24], 96
    %s701 = ssub.s32 256, 1
    %702 = vst [vmem:[%s699] sm:%s701] %v697
    %s703 = scalar_lea.vmem %s86, 48
    %v704 = vlaneseq
    %v705 = vand.u32 %v704, 127
    %v706 = vadd.s32 %v705, 256
    %vm707 = vcmp.lt.s32.totalorder %v706, 320
    %v708 = vsel %vm707, %v656, %v12
    %v709 = vlaneseq
    %v710 = vand.u32 %v709, 127
    %vm711 = vcmp.lt.s32.totalorder %v710, 64
    %v712 = vsel %vm711, %v708, %v12
    %713 = vrot.lane.b32.xlu0 %v712, 64
    %v714 = vpop.permute.xlu0 %713
    %s715 = scalar_lea.vmem %s96, 48
    %v716 = vlaneseq
    %v717 = vand.u32 %v716, 127
    %v718 = vadd.s32 %v717, 128
    %vm719 = vcmp.lt.s32.totalorder %v718, 192
    %v720 = vsel %vm719, %v662, %v13
    %s721 = scalar_lea.vmem %s106, 48
    %v722 = vlaneseq
    %v723 = vand.u32 %v722, 127
    %vm724 = vcmp.lt.s32.totalorder %v723, 64
    %v725 = vsel %vm724, %v14, %v673
    %726 = vrot.lane.b32.xlu0 %v725, 64
    %v727 = vpop.permute.xlu0 %726
    %728 = xla_tuple %v15, %v727
    %729 = xla_tuple %728
    %v730 = vmax.f32 %v15, %v727
    %731 = xla_tuple %v730
    %732 = xla_tuple %v730, %v720
    %733 = xla_tuple %732
    %v734 = vmax.f32 %v730, %v720
    %735 = xla_tuple %v734
    %736 = xla_tuple %v734, %v714
    %737 = xla_tuple %736
    %v738 = vmax.f32 %v734, %v714
    %739 = xla_tuple %v738
    %s740 = scalar_lea.vmem [#allocation24], 104
    %s742 = ssub.s32 256, 1
    %743 = vst [vmem:[%s740] sm:%s742] %v738
    %s744 = scalar_lea.vmem %s86, 56
    %s745 = ssub.s32 0, 0
    %p746 = scmp.lt.s32.totalorder %s745, 0
    %s747 = scalar_select %p746, 0, 255
    %v748 = vld [vmem:[%s744] sm:%s747]
    %s749 = scalar_lea.vmem %s86, 56
    %s750 = scalar_lea.vmem %s96, 56
    %s751 = ssub.s32 0, 0
    %p752 = scmp.lt.s32.totalorder %s751, 0
    %s753 = scalar_select %p752, 0, 255
    %v754 = vld [vmem:[%s750] sm:%s753]
    %s755 = scalar_lea.vmem %s106, 56
    %s756 = ssub.s32 0, 0
    %p757 = scmp.lt.s32.totalorder %s756, 0
    %s758 = scalar_select %p757, 0, 255
    %v759 = vld [vmem:[%s755] sm:%s758]
    %s760 = scalar_lea.vmem %s106, 56
    %v761 = vlaneseq
    %v762 = vand.u32 %v761, 127
    %v763 = vadd.s32 %v762, 128
    %vm764 = vcmp.lt.s32.totalorder %v763, 192
    %v765 = vsel %vm764, %v759, %v14
    %v766 = vlaneseq
    %v767 = vand.u32 %v766, 127
    %vm768 = vcmp.lt.s32.totalorder %v767, 64
    %v769 = vsel %vm768, %v765, %v14
    %770 = vrot.lane.b32.xlu0 %v769, 64
    %v771 = vpop.permute.xlu0 %770
    %s772 = scalar_lea.vmem %s6, 56
    %v773 = vld [vmem:[%s772] sm:$0xff]
    %v774 = vlaneseq
    %v775 = vand.u32 %v774, 127
    %vm777 = vcmp.lt.s32.totalorder %v775, 64
    %v778 = vsel %vm777, %v773, %v15
    %779 = xla_tuple %v778, %v771
    %780 = xla_tuple %779
    %v781 = vmax.f32 %v778, %v771
    %782 = xla_tuple %v781
    %783 = xla_tuple %v781, %v13
    %784 = xla_tuple %783
    %v785 = vmax.f32 %v781, %v13
    %786 = xla_tuple %v785
    %787 = xla_tuple %v785, %v12
    %788 = xla_tuple %787
    %v789 = vmax.f32 %v785, %v12
    %790 = xla_tuple %v789
    %s791 = scalar_lea.vmem [#allocation24], 112
    %s793 = ssub.s32 256, 1
    %794 = vst [vmem:[%s791] sm:%s793] %v789
    %s795 = scalar_lea.vmem %s86, 56
    %v796 = vlaneseq
    %v797 = vand.u32 %v796, 127
    %v798 = vadd.s32 %v797, 256
    %vm799 = vcmp.lt.s32.totalorder %v798, 320
    %v800 = vsel %vm799, %v748, %v12
    %v801 = vlaneseq
    %v802 = vand.u32 %v801, 127
    %vm803 = vcmp.lt.s32.totalorder %v802, 64
    %v804 = vsel %vm803, %v800, %v12
    %805 = vrot.lane.b32.xlu0 %v804, 64
    %v806 = vpop.permute.xlu0 %805
    %s807 = scalar_lea.vmem %s96, 56
    %v808 = vlaneseq
    %v809 = vand.u32 %v808, 127
    %v810 = vadd.s32 %v809, 128
    %vm811 = vcmp.lt.s32.totalorder %v810, 192
    %v812 = vsel %vm811, %v754, %v13
    %s813 = scalar_lea.vmem %s106, 56
    %v814 = vlaneseq
    %v815 = vand.u32 %v814, 127
    %vm816 = vcmp.lt.s32.totalorder %v815, 64
    %v817 = vsel %vm816, %v14, %v765
    %818 = vrot.lane.b32.xlu0 %v817, 64
    %v819 = vpop.permute.xlu0 %818
    %820 = xla_tuple %v15, %v819
    %821 = xla_tuple %820
    %v822 = vmax.f32 %v15, %v819
    %823 = xla_tuple %v822
    %824 = xla_tuple %v822, %v812
    %825 = xla_tuple %824
    %v826 = vmax.f32 %v822, %v812
    %827 = xla_tuple %v826
    %828 = xla_tuple %v826, %v806
    %829 = xla_tuple %828
    %v830 = vmax.f32 %v826, %v806
    %831 = xla_tuple %v830
    %s832 = scalar_lea.vmem [#allocation24], 120
    %s834 = ssub.s32 256, 1
    %835 = vst [vmem:[%s832] sm:%s834] %v830
    %s836 = scalar_lea.vmem %s86, 64
    %s837 = ssub.s32 0, 0
    %p838 = scmp.lt.s32.totalorder %s837, 0
    %s839 = scalar_select %p838, 0, 255
    %v840 = vld [vmem:[%s836] sm:%s839]
    %s841 = scalar_lea.vmem %s86, 64
    %s842 = scalar_lea.vmem %s96, 64
    %s843 = ssub.s32 0, 0
    %p844 = scmp.lt.s32.totalorder %s843, 0
    %s845 = scalar_select %p844, 0, 255
    %v846 = vld [vmem:[%s842] sm:%s845]
    %s847 = scalar_lea.vmem %s106, 64
    %s848 = ssub.s32 0, 0
    %p849 = scmp.lt.s32.totalorder %s848, 0
    %s850 = scalar_select %p849, 0, 255
    %v851 = vld [vmem:[%s847] sm:%s850]
    %s852 = scalar_lea.vmem %s106, 64
    %v853 = vlaneseq
    %v854 = vand.u32 %v853, 127
    %v855 = vadd.s32 %v854, 128
    %vm856 = vcmp.lt.s32.totalorder %v855, 192
    %v857 = vsel %vm856, %v851, %v14
    %v858 = vlaneseq
    %v859 = vand.u32 %v858, 127
    %vm860 = vcmp.lt.s32.totalorder %v859, 64
    %v861 = vsel %vm860, %v857, %v14
    %862 = vrot.lane.b32.xlu0 %v861, 64
    %v863 = vpop.permute.xlu0 %862
    %s864 = scalar_lea.vmem %s6, 64
    %v865 = vld [vmem:[%s864] sm:$0xff]
    %v866 = vlaneseq
    %v867 = vand.u32 %v866, 127
    %vm869 = vcmp.lt.s32.totalorder %v867, 64
    %v870 = vsel %vm869, %v865, %v15
    %871 = xla_tuple %v870, %v863
    %872 = xla_tuple %871
    %v873 = vmax.f32 %v870, %v863
    %874 = xla_tuple %v873
    %875 = xla_tuple %v873, %v13
    %876 = xla_tuple %875
    %v877 = vmax.f32 %v873, %v13
    %878 = xla_tuple %v877
    %879 = xla_tuple %v877, %v12
    %880 = xla_tuple %879
    %v881 = vmax.f32 %v877, %v12
    %882 = xla_tuple %v881
    %s883 = scalar_lea.vmem [#allocation24], 128
    %s885 = ssub.s32 256, 1
    %886 = vst [vmem:[%s883] sm:%s885] %v881
    %s887 = scalar_lea.vmem %s86, 64
    %v888 = vlaneseq
    %v889 = vand.u32 %v888, 127
    %v890 = vadd.s32 %v889, 256
    %vm891 = vcmp.lt.s32.totalorder %v890, 320
    %v892 = vsel %vm891, %v840, %v12
    %v893 = vlaneseq
    %v894 = vand.u32 %v893, 127
    %vm895 = vcmp.lt.s32.totalorder %v894, 64
    %v896 = vsel %vm895, %v892, %v12
    %897 = vrot.lane.b32.xlu0 %v896, 64
    %v898 = vpop.permute.xlu0 %897
    %s899 = scalar_lea.vmem %s96, 64
    %v900 = vlaneseq
    %v901 = vand.u32 %v900, 127
    %v902 = vadd.s32 %v901, 128
    %vm903 = vcmp.lt.s32.totalorder %v902, 192
    %v904 = vsel %vm903, %v846, %v13
    %s905 = scalar_lea.vmem %s106, 64
    %v906 = vlaneseq
    %v907 = vand.u32 %v906, 127
    %vm908 = vcmp.lt.s32.totalorder %v907, 64
    %v909 = vsel %vm908, %v14, %v857
    %910 = vrot.lane.b32.xlu0 %v909, 64
    %v911 = vpop.permute.xlu0 %910
    %912 = xla_tuple %v15, %v911
    %913 = xla_tuple %912
    %v914 = vmax.f32 %v15, %v911
    %915 = xla_tuple %v914
    %916 = xla_tuple %v914, %v904
    %917 = xla_tuple %916
    %v918 = vmax.f32 %v914, %v904
    %919 = xla_tuple %v918
    %920 = xla_tuple %v918, %v898
    %921 = xla_tuple %920
    %v922 = vmax.f32 %v918, %v898
    %923 = xla_tuple %v922
    %s924 = scalar_lea.vmem [#allocation24], 136
    %s926 = ssub.s32 256, 1
    %927 = vst [vmem:[%s924] sm:%s926] %v922
    %s928 = scalar_lea.vmem %s86, 72
    %s929 = ssub.s32 0, 0
    %p930 = scmp.lt.s32.totalorder %s929, 0
    %s931 = scalar_select %p930, 0, 255
    %v932 = vld [vmem:[%s928] sm:%s931]
    %s933 = scalar_lea.vmem %s86, 72
    %s934 = scalar_lea.vmem %s96, 72
    %s935 = ssub.s32 0, 0
    %p936 = scmp.lt.s32.totalorder %s935, 0
    %s937 = scalar_select %p936, 0, 255
    %v938 = vld [vmem:[%s934] sm:%s937]
    %s939 = scalar_lea.vmem %s106, 72
    %s940 = ssub.s32 0, 0
    %p941 = scmp.lt.s32.totalorder %s940, 0
    %s942 = scalar_select %p941, 0, 255
    %v943 = vld [vmem:[%s939] sm:%s942]
    %s944 = scalar_lea.vmem %s106, 72
    %v945 = vlaneseq
    %v946 = vand.u32 %v945, 127
    %v947 = vadd.s32 %v946, 128
    %vm948 = vcmp.lt.s32.totalorder %v947, 192
    %v949 = vsel %vm948, %v943, %v14
    %v950 = vlaneseq
    %v951 = vand.u32 %v950, 127
    %vm952 = vcmp.lt.s32.totalorder %v951, 64
    %v953 = vsel %vm952, %v949, %v14
    %954 = vrot.lane.b32.xlu0 %v953, 64
    %v955 = vpop.permute.xlu0 %954
    %s956 = scalar_lea.vmem %s6, 72
    %v957 = vld [vmem:[%s956] sm:$0xff]
    %v958 = vlaneseq
    %v959 = vand.u32 %v958, 127
    %vm961 = vcmp.lt.s32.totalorder %v959, 64
    %v962 = vsel %vm961, %v957, %v15
    %963 = xla_tuple %v962, %v955
    %964 = xla_tuple %963
    %v965 = vmax.f32 %v962, %v955
    %966 = xla_tuple %v965
    %967 = xla_tuple %v965, %v13
    %968 = xla_tuple %967
    %v969 = vmax.f32 %v965, %v13
    %970 = xla_tuple %v969
    %971 = xla_tuple %v969, %v12
    %972 = xla_tuple %971
    %v973 = vmax.f32 %v969, %v12
    %974 = xla_tuple %v973
    %s975 = scalar_lea.vmem [#allocation24], 144
    %s977 = ssub.s32 256, 1
    %978 = vst [vmem:[%s975] sm:%s977] %v973
    %s979 = scalar_lea.vmem %s86, 72
    %v980 = vlaneseq
    %v981 = vand.u32 %v980, 127
    %v982 = vadd.s32 %v981, 256
    %vm983 = vcmp.lt.s32.totalorder %v982, 320
    %v984 = vsel %vm983, %v932, %v12
    %v985 = vlaneseq
    %v986 = vand.u32 %v985, 127
    %vm987 = vcmp.lt.s32.totalorder %v986, 64
    %v988 = vsel %vm987, %v984, %v12
    %989 = vrot.lane.b32.xlu0 %v988, 64
    %v990 = vpop.permute.xlu0 %989
    %s991 = scalar_lea.vmem %s96, 72
    %v992 = vlaneseq
    %v993 = vand.u32 %v992, 127
    %v994 = vadd.s32 %v993, 128
    %vm995 = vcmp.lt.s32.totalorder %v994, 192
    %v996 = vsel %vm995, %v938, %v13
    %s997 = scalar_lea.vmem %s106, 72
    %v998 = vlaneseq
    %v999 = vand.u32 %v998, 127
    %vm1000 = vcmp.lt.s32.totalorder %v999, 64
    %v1001 = vsel %vm1000, %v14, %v949
    %1002 = vrot.lane.b32.xlu0 %v1001, 64
    %v1003 = vpop.permute.xlu0 %1002
    %1004 = xla_tuple %v15, %v1003
    %1005 = xla_tuple %1004
    %v1006 = vmax.f32 %v15, %v1003
    %1007 = xla_tuple %v1006
    %1008 = xla_tuple %v1006, %v996
    %1009 = xla_tuple %1008
    %v1010 = vmax.f32 %v1006, %v996
    %1011 = xla_tuple %v1010
    %1012 = xla_tuple %v1010, %v990
    %1013 = xla_tuple %1012
    %v1014 = vmax.f32 %v1010, %v990
    %1015 = xla_tuple %v1014
    %s1016 = scalar_lea.vmem [#allocation24], 152
    %s1018 = ssub.s32 256, 1
    %1019 = vst [vmem:[%s1016] sm:%s1018] %v1014
    %s1020 = scalar_lea.vmem %s86, 80
    %s1021 = ssub.s32 0, 0
    %p1022 = scmp.lt.s32.totalorder %s1021, 0
    %s1023 = scalar_select %p1022, 0, 255
    %v1024 = vld [vmem:[%s1020] sm:%s1023]
    %s1025 = scalar_lea.vmem %s86, 80
    %s1026 = scalar_lea.vmem %s96, 80
    %s1027 = ssub.s32 0, 0
    %p1028 = scmp.lt.s32.totalorder %s1027, 0
    %s1029 = scalar_select %p1028, 0, 255
    %v1030 = vld [vmem:[%s1026] sm:%s1029]
    %s1031 = scalar_lea.vmem %s106, 80
    %s1032 = ssub.s32 0, 0
    %p1033 = scmp.lt.s32.totalorder %s1032, 0
    %s1034 = scalar_select %p1033, 0, 255
    %v1035 = vld [vmem:[%s1031] sm:%s1034]
    %s1036 = scalar_lea.vmem %s106, 80
    %v1037 = vlaneseq
    %v1038 = vand.u32 %v1037, 127
    %v1039 = vadd.s32 %v1038, 128
    %vm1040 = vcmp.lt.s32.totalorder %v1039, 192
    %v1041 = vsel %vm1040, %v1035, %v14
    %v1042 = vlaneseq
    %v1043 = vand.u32 %v1042, 127
    %vm1044 = vcmp.lt.s32.totalorder %v1043, 64
    %v1045 = vsel %vm1044, %v1041, %v14
    %1046 = vrot.lane.b32.xlu0 %v1045, 64
    %v1047 = vpop.permute.xlu0 %1046
    %s1048 = scalar_lea.vmem %s6, 80
    %v1049 = vld [vmem:[%s1048] sm:$0xff]
    %v1050 = vlaneseq
    %v1051 = vand.u32 %v1050, 127
    %vm1053 = vcmp.lt.s32.totalorder %v1051, 64
    %v1054 = vsel %vm1053, %v1049, %v15
    %1055 = xla_tuple %v1054, %v1047
    %1056 = xla_tuple %1055
    %v1057 = vmax.f32 %v1054, %v1047
    %1058 = xla_tuple %v1057
    %1059 = xla_tuple %v1057, %v13
    %1060 = xla_tuple %1059
    %v1061 = vmax.f32 %v1057, %v13
    %1062 = xla_tuple %v1061
    %1063 = xla_tuple %v1061, %v12
    %1064 = xla_tuple %1063
    %v1065 = vmax.f32 %v1061, %v12
    %1066 = xla_tuple %v1065
    %s1067 = scalar_lea.vmem [#allocation24], 160
    %s1069 = ssub.s32 256, 1
    %1070 = vst [vmem:[%s1067] sm:%s1069] %v1065
    %s1071 = scalar_lea.vmem %s86, 80
    %v1072 = vlaneseq
    %v1073 = vand.u32 %v1072, 127
    %v1074 = vadd.s32 %v1073, 256
    %vm1075 = vcmp.lt.s32.totalorder %v1074, 320
    %v1076 = vsel %vm1075, %v1024, %v12
    %v1077 = vlaneseq
    %v1078 = vand.u32 %v1077, 127
    %vm1079 = vcmp.lt.s32.totalorder %v1078, 64
    %v1080 = vsel %vm1079, %v1076, %v12
    %1081 = vrot.lane.b32.xlu0 %v1080, 64
    %v1082 = vpop.permute.xlu0 %1081
    %s1083 = scalar_lea.vmem %s96, 80
    %v1084 = vlaneseq
    %v1085 = vand.u32 %v1084, 127
    %v1086 = vadd.s32 %v1085, 128
    %vm1087 = vcmp.lt.s32.totalorder %v1086, 192
    %v1088 = vsel %vm1087, %v1030, %v13
    %s1089 = scalar_lea.vmem %s106, 80
    %v1090 = vlaneseq
    %v1091 = vand.u32 %v1090, 127
    %vm1092 = vcmp.lt.s32.totalorder %v1091, 64
    %v1093 = vsel %vm1092, %v14, %v1041
    %1094 = vrot.lane.b32.xlu0 %v1093, 64
    %v1095 = vpop.permute.xlu0 %1094
    %1096 = xla_tuple %v15, %v1095
    %1097 = xla_tuple %1096
    %v1098 = vmax.f32 %v15, %v1095
    %1099 = xla_tuple %v1098
    %1100 = xla_tuple %v1098, %v1088
    %1101 = xla_tuple %1100
    %v1102 = vmax.f32 %v1098, %v1088
    %1103 = xla_tuple %v1102
    %1104 = xla_tuple %v1102, %v1082
    %1105 = xla_tuple %1104
    %v1106 = vmax.f32 %v1102, %v1082
    %1107 = xla_tuple %v1106
    %s1108 = scalar_lea.vmem [#allocation24], 168
    %s1110 = ssub.s32 256, 1
    %1111 = vst [vmem:[%s1108] sm:%s1110] %v1106
    %s1112 = scalar_lea.vmem %s86, 88
    %s1113 = ssub.s32 0, 0
    %p1114 = scmp.lt.s32.totalorder %s1113, 0
    %s1115 = scalar_select %p1114, 0, 255
    %v1116 = vld [vmem:[%s1112] sm:%s1115]
    %s1117 = scalar_lea.vmem %s86, 88
    %s1118 = scalar_lea.vmem %s96, 88
    %s1119 = ssub.s32 0, 0
    %p1120 = scmp.lt.s32.totalorder %s1119, 0
    %s1121 = scalar_select %p1120, 0, 255
    %v1122 = vld [vmem:[%s1118] sm:%s1121]
    %s1123 = scalar_lea.vmem %s106, 88
    %s1124 = ssub.s32 0, 0
    %p1125 = scmp.lt.s32.totalorder %s1124, 0
    %s1126 = scalar_select %p1125, 0, 255
    %v1127 = vld [vmem:[%s1123] sm:%s1126]
    %s1128 = scalar_lea.vmem %s106, 88
    %v1129 = vlaneseq
    %v1130 = vand.u32 %v1129, 127
    %v1131 = vadd.s32 %v1130, 128
    %vm1132 = vcmp.lt.s32.totalorder %v1131, 192
    %v1133 = vsel %vm1132, %v1127, %v14
    %v1134 = vlaneseq
    %v1135 = vand.u32 %v1134, 127
    %vm1136 = vcmp.lt.s32.totalorder %v1135, 64
    %v1137 = vsel %vm1136, %v1133, %v14
    %1138 = vrot.lane.b32.xlu0 %v1137, 64
    %v1139 = vpop.permute.xlu0 %1138
    %s1140 = scalar_lea.vmem %s6, 88
    %v1141 = vld [vmem:[%s1140] sm:$0xff]
    %v1142 = vlaneseq
    %v1143 = vand.u32 %v1142, 127
    %vm1145 = vcmp.lt.s32.totalorder %v1143, 64
    %v1146 = vsel %vm1145, %v1141, %v15
    %1147 = xla_tuple %v1146, %v1139
    %1148 = xla_tuple %1147
    %v1149 = vmax.f32 %v1146, %v1139
    %1150 = xla_tuple %v1149
    %1151 = xla_tuple %v1149, %v13
    %1152 = xla_tuple %1151
    %v1153 = vmax.f32 %v1149, %v13
    %1154 = xla_tuple %v1153
    %1155 = xla_tuple %v1153, %v12
    %1156 = xla_tuple %1155
    %v1157 = vmax.f32 %v1153, %v12
    %1158 = xla_tuple %v1157
    %s1159 = scalar_lea.vmem [#allocation24], 176
    %s1161 = ssub.s32 256, 1
    %1162 = vst [vmem:[%s1159] sm:%s1161] %v1157
    %s1163 = scalar_lea.vmem %s86, 88
    %v1164 = vlaneseq
    %v1165 = vand.u32 %v1164, 127
    %v1166 = vadd.s32 %v1165, 256
    %vm1167 = vcmp.lt.s32.totalorder %v1166, 320
    %v1168 = vsel %vm1167, %v1116, %v12
    %v1169 = vlaneseq
    %v1170 = vand.u32 %v1169, 127
    %vm1171 = vcmp.lt.s32.totalorder %v1170, 64
    %v1172 = vsel %vm1171, %v1168, %v12
    %1173 = vrot.lane.b32.xlu0 %v1172, 64
    %v1174 = vpop.permute.xlu0 %1173
    %s1175 = scalar_lea.vmem %s96, 88
    %v1176 = vlaneseq
    %v1177 = vand.u32 %v1176, 127
    %v1178 = vadd.s32 %v1177, 128
    %vm1179 = vcmp.lt.s32.totalorder %v1178, 192
    %v1180 = vsel %vm1179, %v1122, %v13
    %s1181 = scalar_lea.vmem %s106, 88
    %v1182 = vlaneseq
    %v1183 = vand.u32 %v1182, 127
    %vm1184 = vcmp.lt.s32.totalorder %v1183, 64
    %v1185 = vsel %vm1184, %v14, %v1133
    %1186 = vrot.lane.b32.xlu0 %v1185, 64
    %v1187 = vpop.permute.xlu0 %1186
    %1188 = xla_tuple %v15, %v1187
    %1189 = xla_tuple %1188
    %v1190 = vmax.f32 %v15, %v1187
    %1191 = xla_tuple %v1190
    %1192 = xla_tuple %v1190, %v1180
    %1193 = xla_tuple %1192
    %v1194 = vmax.f32 %v1190, %v1180
    %1195 = xla_tuple %v1194
    %1196 = xla_tuple %v1194, %v1174
    %1197 = xla_tuple %1196
    %v1198 = vmax.f32 %v1194, %v1174
    %1199 = xla_tuple %v1198
    %s1200 = scalar_lea.vmem [#allocation24], 184
    %s1202 = ssub.s32 256, 1
    %1203 = vst [vmem:[%s1200] sm:%s1202] %v1198
    %s1204 = scalar_lea.vmem %s86, 96
    %s1205 = ssub.s32 0, 0
    %p1206 = scmp.lt.s32.totalorder %s1205, 0
    %s1207 = scalar_select %p1206, 0, 255
    %v1208 = vld [vmem:[%s1204] sm:%s1207]
    %s1209 = scalar_lea.vmem %s86, 96
    %s1210 = scalar_lea.vmem %s96, 96
    %s1211 = ssub.s32 0, 0
    %p1212 = scmp.lt.s32.totalorder %s1211, 0
    %s1213 = scalar_select %p1212, 0, 255
    %v1214 = vld [vmem:[%s1210] sm:%s1213]
    %s1215 = scalar_lea.vmem %s106, 96
    %s1216 = ssub.s32 0, 0
    %p1217 = scmp.lt.s32.totalorder %s1216, 0
    %s1218 = scalar_select %p1217, 0, 255
    %v1219 = vld [vmem:[%s1215] sm:%s1218]
    %s1220 = scalar_lea.vmem %s106, 96
    %v1221 = vlaneseq
    %v1222 = vand.u32 %v1221, 127
    %v1223 = vadd.s32 %v1222, 128
    %vm1224 = vcmp.lt.s32.totalorder %v1223, 192
    %v1225 = vsel %vm1224, %v1219, %v14
    %v1226 = vlaneseq
    %v1227 = vand.u32 %v1226, 127
    %vm1228 = vcmp.lt.s32.totalorder %v1227, 64
    %v1229 = vsel %vm1228, %v1225, %v14
    %1230 = vrot.lane.b32.xlu0 %v1229, 64
    %v1231 = vpop.permute.xlu0 %1230
    %s1232 = scalar_lea.vmem %s6, 96
    %v1233 = vld [vmem:[%s1232] sm:$0xff]
    %v1234 = vlaneseq
    %v1235 = vand.u32 %v1234, 127
    %vm1237 = vcmp.lt.s32.totalorder %v1235, 64
    %v1238 = vsel %vm1237, %v1233, %v15
    %1239 = xla_tuple %v1238, %v1231
    %1240 = xla_tuple %1239
    %v1241 = vmax.f32 %v1238, %v1231
    %1242 = xla_tuple %v1241
    %1243 = xla_tuple %v1241, %v13
    %1244 = xla_tuple %1243
    %v1245 = vmax.f32 %v1241, %v13
    %1246 = xla_tuple %v1245
    %1247 = xla_tuple %v1245, %v12
    %1248 = xla_tuple %1247
    %v1249 = vmax.f32 %v1245, %v12
    %1250 = xla_tuple %v1249
    %s1251 = scalar_lea.vmem [#allocation24], 192
    %s1253 = ssub.s32 256, 1
    %1254 = vst [vmem:[%s1251] sm:%s1253] %v1249
    %s1255 = scalar_lea.vmem %s86, 96
    %v1256 = vlaneseq
    %v1257 = vand.u32 %v1256, 127
    %v1258 = vadd.s32 %v1257, 256
    %vm1259 = vcmp.lt.s32.totalorder %v1258, 320
    %v1260 = vsel %vm1259, %v1208, %v12
    %v1261 = vlaneseq
    %v1262 = vand.u32 %v1261, 127
    %vm1263 = vcmp.lt.s32.totalorder %v1262, 64
    %v1264 = vsel %vm1263, %v1260, %v12
    %1265 = vrot.lane.b32.xlu0 %v1264, 64
    %v1266 = vpop.permute.xlu0 %1265
    %s1267 = scalar_lea.vmem %s96, 96
    %v1268 = vlaneseq
    %v1269 = vand.u32 %v1268, 127
    %v1270 = vadd.s32 %v1269, 128
    %vm1271 = vcmp.lt.s32.totalorder %v1270, 192
    %v1272 = vsel %vm1271, %v1214, %v13
    %s1273 = scalar_lea.vmem %s106, 96
    %v1274 = vlaneseq
    %v1275 = vand.u32 %v1274, 127
    %vm1276 = vcmp.lt.s32.totalorder %v1275, 64
    %v1277 = vsel %vm1276, %v14, %v1225
    %1278 = vrot.lane.b32.xlu0 %v1277, 64
    %v1279 = vpop.permute.xlu0 %1278
    %1280 = xla_tuple %v15, %v1279
    %1281 = xla_tuple %1280
    %v1282 = vmax.f32 %v15, %v1279
    %1283 = xla_tuple %v1282
    %1284 = xla_tuple %v1282, %v1272
    %1285 = xla_tuple %1284
    %v1286 = vmax.f32 %v1282, %v1272
    %1287 = xla_tuple %v1286
    %1288 = xla_tuple %v1286, %v1266
    %1289 = xla_tuple %1288
    %v1290 = vmax.f32 %v1286, %v1266
    %1291 = xla_tuple %v1290
    %s1292 = scalar_lea.vmem [#allocation24], 200
    %s1294 = ssub.s32 256, 1
    %1295 = vst [vmem:[%s1292] sm:%s1294] %v1290
    %s1296 = scalar_lea.vmem %s86, 104
    %s1297 = ssub.s32 0, 0
    %p1298 = scmp.lt.s32.totalorder %s1297, 0
    %s1299 = scalar_select %p1298, 0, 255
    %v1300 = vld [vmem:[%s1296] sm:%s1299]
    %s1301 = scalar_lea.vmem %s86, 104
    %s1302 = scalar_lea.vmem %s96, 104
    %s1303 = ssub.s32 0, 0
    %p1304 = scmp.lt.s32.totalorder %s1303, 0
    %s1305 = scalar_select %p1304, 0, 255
    %v1306 = vld [vmem:[%s1302] sm:%s1305]
    %s1307 = scalar_lea.vmem %s106, 104
    %s1308 = ssub.s32 0, 0
    %p1309 = scmp.lt.s32.totalorder %s1308, 0
    %s1310 = scalar_select %p1309, 0, 255
    %v1311 = vld [vmem:[%s1307] sm:%s1310]
    %s1312 = scalar_lea.vmem %s106, 104
    %v1313 = vlaneseq
    %v1314 = vand.u32 %v1313, 127
    %v1315 = vadd.s32 %v1314, 128
    %vm1316 = vcmp.lt.s32.totalorder %v1315, 192
    %v1317 = vsel %vm1316, %v1311, %v14
    %v1318 = vlaneseq
    %v1319 = vand.u32 %v1318, 127
    %vm1320 = vcmp.lt.s32.totalorder %v1319, 64
    %v1321 = vsel %vm1320, %v1317, %v14
    %1322 = vrot.lane.b32.xlu0 %v1321, 64
    %v1323 = vpop.permute.xlu0 %1322
    %s1324 = scalar_lea.vmem %s6, 104
    %v1325 = vld [vmem:[%s1324] sm:$0xff]
    %v1326 = vlaneseq
    %v1327 = vand.u32 %v1326, 127
    %vm1329 = vcmp.lt.s32.totalorder %v1327, 64
    %v1330 = vsel %vm1329, %v1325, %v15
    %1331 = xla_tuple %v1330, %v1323
    %1332 = xla_tuple %1331
    %v1333 = vmax.f32 %v1330, %v1323
    %1334 = xla_tuple %v1333
    %1335 = xla_tuple %v1333, %v13
    %1336 = xla_tuple %1335
    %v1337 = vmax.f32 %v1333, %v13
    %1338 = xla_tuple %v1337
    %1339 = xla_tuple %v1337, %v12
    %1340 = xla_tuple %1339
    %v1341 = vmax.f32 %v1337, %v12
    %1342 = xla_tuple %v1341
    %s1343 = scalar_lea.vmem [#allocation24], 208
    %s1345 = ssub.s32 256, 1
    %1346 = vst [vmem:[%s1343] sm:%s1345] %v1341
    %s1347 = scalar_lea.vmem %s86, 104
    %v1348 = vlaneseq
    %v1349 = vand.u32 %v1348, 127
    %v1350 = vadd.s32 %v1349, 256
    %vm1351 = vcmp.lt.s32.totalorder %v1350, 320
    %v1352 = vsel %vm1351, %v1300, %v12
    %v1353 = vlaneseq
    %v1354 = vand.u32 %v1353, 127
    %vm1355 = vcmp.lt.s32.totalorder %v1354, 64
    %v1356 = vsel %vm1355, %v1352, %v12
    %1357 = vrot.lane.b32.xlu0 %v1356, 64
    %v1358 = vpop.permute.xlu0 %1357
    %s1359 = scalar_lea.vmem %s96, 104
    %v1360 = vlaneseq
    %v1361 = vand.u32 %v1360, 127
    %v1362 = vadd.s32 %v1361, 128
    %vm1363 = vcmp.lt.s32.totalorder %v1362, 192
    %v1364 = vsel %vm1363, %v1306, %v13
    %s1365 = scalar_lea.vmem %s106, 104
    %v1366 = vlaneseq
    %v1367 = vand.u32 %v1366, 127
    %vm1368 = vcmp.lt.s32.totalorder %v1367, 64
    %v1369 = vsel %vm1368, %v14, %v1317
    %1370 = vrot.lane.b32.xlu0 %v1369, 64
    %v1371 = vpop.permute.xlu0 %1370
    %1372 = xla_tuple %v15, %v1371
    %1373 = xla_tuple %1372
    %v1374 = vmax.f32 %v15, %v1371
    %1375 = xla_tuple %v1374
    %1376 = xla_tuple %v1374, %v1364
    %1377 = xla_tuple %1376
    %v1378 = vmax.f32 %v1374, %v1364
    %1379 = xla_tuple %v1378
    %1380 = xla_tuple %v1378, %v1358
    %1381 = xla_tuple %1380
    %v1382 = vmax.f32 %v1378, %v1358
    %1383 = xla_tuple %v1382
    %s1384 = scalar_lea.vmem [#allocation24], 216
    %s1386 = ssub.s32 256, 1
    %1387 = vst [vmem:[%s1384] sm:%s1386] %v1382
    %s1388 = scalar_lea.vmem %s86, 112
    %s1389 = ssub.s32 0, 0
    %p1390 = scmp.lt.s32.totalorder %s1389, 0
    %s1391 = scalar_select %p1390, 0, 255
    %v1392 = vld [vmem:[%s1388] sm:%s1391]
    %s1393 = scalar_lea.vmem %s86, 112
    %s1394 = scalar_lea.vmem %s96, 112
    %s1395 = ssub.s32 0, 0
    %p1396 = scmp.lt.s32.totalorder %s1395, 0
    %s1397 = scalar_select %p1396, 0, 255
    %v1398 = vld [vmem:[%s1394] sm:%s1397]
    %s1399 = scalar_lea.vmem %s106, 112
    %s1400 = ssub.s32 0, 0
    %p1401 = scmp.lt.s32.totalorder %s1400, 0
    %s1402 = scalar_select %p1401, 0, 255
    %v1403 = vld [vmem:[%s1399] sm:%s1402]
    %s1404 = scalar_lea.vmem %s106, 112
    %v1405 = vlaneseq
    %v1406 = vand.u32 %v1405, 127
    %v1407 = vadd.s32 %v1406, 128
    %vm1408 = vcmp.lt.s32.totalorder %v1407, 192
    %v1409 = vsel %vm1408, %v1403, %v14
    %v1410 = vlaneseq
    %v1411 = vand.u32 %v1410, 127
    %vm1412 = vcmp.lt.s32.totalorder %v1411, 64
    %v1413 = vsel %vm1412, %v1409, %v14
    %1414 = vrot.lane.b32.xlu0 %v1413, 64
    %v1415 = vpop.permute.xlu0 %1414
    %s1416 = scalar_lea.vmem %s6, 112
    %v1417 = vld [vmem:[%s1416] sm:$0xff]
    %v1418 = vlaneseq
    %v1419 = vand.u32 %v1418, 127
    %vm1421 = vcmp.lt.s32.totalorder %v1419, 64
    %v1422 = vsel %vm1421, %v1417, %v15
    %1423 = xla_tuple %v1422, %v1415
    %1424 = xla_tuple %1423
    %v1425 = vmax.f32 %v1422, %v1415
    %1426 = xla_tuple %v1425
    %1427 = xla_tuple %v1425, %v13
    %1428 = xla_tuple %1427
    %v1429 = vmax.f32 %v1425, %v13
    %1430 = xla_tuple %v1429
    %1431 = xla_tuple %v1429, %v12
    %1432 = xla_tuple %1431
    %v1433 = vmax.f32 %v1429, %v12
    %1434 = xla_tuple %v1433
    %s1435 = scalar_lea.vmem [#allocation24], 224
    %s1437 = ssub.s32 256, 1
    %1438 = vst [vmem:[%s1435] sm:%s1437] %v1433
    %s1439 = scalar_lea.vmem %s86, 112
    %v1440 = vlaneseq
    %v1441 = vand.u32 %v1440, 127
    %v1442 = vadd.s32 %v1441, 256
    %vm1443 = vcmp.lt.s32.totalorder %v1442, 320
    %v1444 = vsel %vm1443, %v1392, %v12
    %v1445 = vlaneseq
    %v1446 = vand.u32 %v1445, 127
    %vm1447 = vcmp.lt.s32.totalorder %v1446, 64
    %v1448 = vsel %vm1447, %v1444, %v12
    %1449 = vrot.lane.b32.xlu0 %v1448, 64
    %v1450 = vpop.permute.xlu0 %1449
    %s1451 = scalar_lea.vmem %s96, 112
    %v1452 = vlaneseq
    %v1453 = vand.u32 %v1452, 127
    %v1454 = vadd.s32 %v1453, 128
    %vm1455 = vcmp.lt.s32.totalorder %v1454, 192
    %v1456 = vsel %vm1455, %v1398, %v13
    %s1457 = scalar_lea.vmem %s106, 112
    %v1458 = vlaneseq
    %v1459 = vand.u32 %v1458, 127
    %vm1460 = vcmp.lt.s32.totalorder %v1459, 64
    %v1461 = vsel %vm1460, %v14, %v1409
    %1462 = vrot.lane.b32.xlu0 %v1461, 64
    %v1463 = vpop.permute.xlu0 %1462
    %1464 = xla_tuple %v15, %v1463
    %1465 = xla_tuple %1464
    %v1466 = vmax.f32 %v15, %v1463
    %1467 = xla_tuple %v1466
    %1468 = xla_tuple %v1466, %v1456
    %1469 = xla_tuple %1468
    %v1470 = vmax.f32 %v1466, %v1456
    %1471 = xla_tuple %v1470
    %1472 = xla_tuple %v1470, %v1450
    %1473 = xla_tuple %1472
    %v1474 = vmax.f32 %v1470, %v1450
    %1475 = xla_tuple %v1474
    %s1476 = scalar_lea.vmem [#allocation24], 232
    %s1478 = ssub.s32 256, 1
    %1479 = vst [vmem:[%s1476] sm:%s1478] %v1474
    %s1480 = scalar_lea.vmem %s86, 120
    %s1481 = ssub.s32 0, 0
    %p1482 = scmp.lt.s32.totalorder %s1481, 0
    %s1483 = scalar_select %p1482, 0, 255
    %v1484 = vld [vmem:[%s1480] sm:%s1483]
    %s1485 = scalar_lea.vmem %s86, 120
    %s1486 = scalar_lea.vmem %s96, 120
    %s1487 = ssub.s32 0, 0
    %p1488 = scmp.lt.s32.totalorder %s1487, 0
    %s1489 = scalar_select %p1488, 0, 255
    %v1490 = vld [vmem:[%s1486] sm:%s1489]
    %s1491 = scalar_lea.vmem %s106, 120
    %s1492 = ssub.s32 0, 0
    %p1493 = scmp.lt.s32.totalorder %s1492, 0
    %s1494 = scalar_select %p1493, 0, 255
    %v1495 = vld [vmem:[%s1491] sm:%s1494]
    %s1496 = scalar_lea.vmem %s106, 120
    %v1497 = vlaneseq
    %v1498 = vand.u32 %v1497, 127
    %v1499 = vadd.s32 %v1498, 128
    %vm1500 = vcmp.lt.s32.totalorder %v1499, 192
    %v1501 = vsel %vm1500, %v1495, %v14
    %v1502 = vlaneseq
    %v1503 = vand.u32 %v1502, 127
    %vm1504 = vcmp.lt.s32.totalorder %v1503, 64
    %v1505 = vsel %vm1504, %v1501, %v14
    %1506 = vrot.lane.b32.xlu0 %v1505, 64
    %v1507 = vpop.permute.xlu0 %1506
    %s1508 = scalar_lea.vmem %s6, 120
    %v1509 = vld [vmem:[%s1508] sm:$0xff]
    %v1510 = vlaneseq
    %v1511 = vand.u32 %v1510, 127
    %vm1513 = vcmp.lt.s32.totalorder %v1511, 64
    %v1514 = vsel %vm1513, %v1509, %v15
    %1515 = xla_tuple %v1514, %v1507
    %1516 = xla_tuple %1515
    %v1517 = vmax.f32 %v1514, %v1507
    %1518 = xla_tuple %v1517
    %1519 = xla_tuple %v1517, %v13
    %1520 = xla_tuple %1519
    %v1521 = vmax.f32 %v1517, %v13
    %1522 = xla_tuple %v1521
    %1523 = xla_tuple %v1521, %v12
    %1524 = xla_tuple %1523
    %v1525 = vmax.f32 %v1521, %v12
    %1526 = xla_tuple %v1525
    %s1527 = scalar_lea.vmem [#allocation24], 240
    %s1529 = ssub.s32 256, 1
    %1530 = vst [vmem:[%s1527] sm:%s1529] %v1525
    %s1531 = scalar_lea.vmem %s86, 120
    %v1532 = vlaneseq
    %v1533 = vand.u32 %v1532, 127
    %v1534 = vadd.s32 %v1533, 256
    %vm1535 = vcmp.lt.s32.totalorder %v1534, 320
    %v1536 = vsel %vm1535, %v1484, %v12
    %v1537 = vlaneseq
    %v1538 = vand.u32 %v1537, 127
    %vm1539 = vcmp.lt.s32.totalorder %v1538, 64
    %v1540 = vsel %vm1539, %v1536, %v12
    %1541 = vrot.lane.b32.xlu0 %v1540, 64
    %v1542 = vpop.permute.xlu0 %1541
    %s1543 = scalar_lea.vmem %s96, 120
    %v1544 = vlaneseq
    %v1545 = vand.u32 %v1544, 127
    %v1546 = vadd.s32 %v1545, 128
    %vm1547 = vcmp.lt.s32.totalorder %v1546, 192
    %v1548 = vsel %vm1547, %v1490, %v13
    %s1549 = scalar_lea.vmem %s106, 120
    %v1550 = vlaneseq
    %v1551 = vand.u32 %v1550, 127
    %vm1552 = vcmp.lt.s32.totalorder %v1551, 64
    %v1553 = vsel %vm1552, %v14, %v1501
    %1554 = vrot.lane.b32.xlu0 %v1553, 64
    %v1555 = vpop.permute.xlu0 %1554
    %1556 = xla_tuple %v15, %v1555
    %1557 = xla_tuple %1556
    %v1558 = vmax.f32 %v15, %v1555
    %1559 = xla_tuple %v1558
    %1560 = xla_tuple %v1558, %v1548
    %1561 = xla_tuple %1560
    %v1562 = vmax.f32 %v1558, %v1548
    %1563 = xla_tuple %v1562
    %1564 = xla_tuple %v1562, %v1542
    %1565 = xla_tuple %1564
    %v1566 = vmax.f32 %v1562, %v1542
    %1567 = xla_tuple %v1566
    %s1568 = scalar_lea.vmem [#allocation24], 248
    %s1570 = ssub.s32 256, 1
    %1571 = vst [vmem:[%s1568] sm:%s1570] %v1566
    %v1573 = vld [vmem:[#allocation24] sm:$0xff]
    %v1574 = vld [vmem:[#allocation24 + $0x8] sm:$0xff]
    %v1575 = vld [vmem:[#allocation24 + $0x10] sm:$0xff]
    %v1576 = vld [vmem:[#allocation24 + $0x18] sm:$0xff]
    %v1577 = vld [vmem:[#allocation24 + $0x20] sm:$0xff]
    %v1578 = vld [vmem:[#allocation24 + $0x28] sm:$0xff]
    %v1579 = vld [vmem:[#allocation24 + $0x30] sm:$0xff]
    %v1580 = vld [vmem:[#allocation24 + $0x38] sm:$0xff]
    %v1581 = vld [vmem:[#allocation24 + $0x40] sm:$0xff]
    %v1582 = vld [vmem:[#allocation24 + $0x48] sm:$0xff]
    %v1583 = vld [vmem:[#allocation24 + $0x50] sm:$0xff]
    %v1584 = vld [vmem:[#allocation24 + $0x58] sm:$0xff]
    %v1585 = vld [vmem:[#allocation24 + $0x60] sm:$0xff]
    %v1586 = vld [vmem:[#allocation24 + $0x68] sm:$0xff]
    %v1587 = vld [vmem:[#allocation24 + $0x70] sm:$0xff]
    %v1588 = vld [vmem:[#allocation24 + $0x78] sm:$0xff]
    %v1589 = vld [vmem:[#allocation24 + $0x80] sm:$0xff]
    %v1590 = vld [vmem:[#allocation24 + $0x88] sm:$0xff]
    %v1591 = vld [vmem:[#allocation24 + $0x90] sm:$0xff]
    %v1592 = vld [vmem:[#allocation24 + $0x98] sm:$0xff]
    %v1593 = vld [vmem:[#allocation24 + $0xa0] sm:$0xff]
    %v1594 = vld [vmem:[#allocation24 + $0xa8] sm:$0xff]
    %v1595 = vld [vmem:[#allocation24 + $0xb0] sm:$0xff]
    %v1596 = vld [vmem:[#allocation24 + $0xb8] sm:$0xff]
    %v1597 = vld [vmem:[#allocation24 + $0xc0] sm:$0xff]
    %v1598 = vld [vmem:[#allocation24 + $0xc8] sm:$0xff]
    %v1599 = vld [vmem:[#allocation24 + $0xd0] sm:$0xff]
    %v1600 = vld [vmem:[#allocation24 + $0xd8] sm:$0xff]
    %v1601 = vld [vmem:[#allocation24 + $0xe0] sm:$0xff]
    %v1602 = vld [vmem:[#allocation24 + $0xe8] sm:$0xff]
    %v1603 = vld [vmem:[#allocation24 + $0xf0] sm:$0xff]
    %v1604 = vld [vmem:[#allocation24 + $0xf8] sm:$0xff]
    %v1605 = vadd.f32 %v1573, %v1574
    %1606 = vadd.xlane.f32.xlu0 %v1605
    %v1607 = vpop.xlane.xlu0 %1606
    %v1608 = vadd.f32 %v1575, %v1576
    %1609 = vadd.xlane.f32.xlu0 %v1608
    %v1610 = vpop.xlane.xlu0 %1609
    %v1611 = vadd.f32 %v1577, %v1578
    %1612 = vadd.xlane.f32.xlu0 %v1611
    %v1613 = vpop.xlane.xlu0 %1612
    %v1614 = vadd.f32 %v1579, %v1580
    %1615 = vadd.xlane.f32.xlu0 %v1614
    %v1616 = vpop.xlane.xlu0 %1615
    %v1617 = vadd.f32 %v1581, %v1582
    %1618 = vadd.xlane.f32.xlu0 %v1617
    %v1619 = vpop.xlane.xlu0 %1618
    %v1620 = vadd.f32 %v1583, %v1584
    %1621 = vadd.xlane.f32.xlu0 %v1620
    %v1622 = vpop.xlane.xlu0 %1621
    %v1623 = vadd.f32 %v1585, %v1586
    %1624 = vadd.xlane.f32.xlu0 %v1623
    %v1625 = vpop.xlane.xlu0 %1624
    %v1626 = vadd.f32 %v1587, %v1588
    %1627 = vadd.xlane.f32.xlu0 %v1626
    %v1628 = vpop.xlane.xlu0 %1627
    %v1629 = vadd.f32 %v1589, %v1590
    %1630 = vadd.xlane.f32.xlu0 %v1629
    %v1631 = vpop.xlane.xlu0 %1630
    %v1632 = vadd.f32 %v1591, %v1592
    %1633 = vadd.xlane.f32.xlu0 %v1632
    %v1634 = vpop.xlane.xlu0 %1633
    %v1635 = vadd.f32 %v1593, %v1594
    %1636 = vadd.xlane.f32.xlu0 %v1635
    %v1637 = vpop.xlane.xlu0 %1636
    %v1638 = vadd.f32 %v1595, %v1596
    %1639 = vadd.xlane.f32.xlu0 %v1638
    %v1640 = vpop.xlane.xlu0 %1639
    %v1641 = vadd.f32 %v1597, %v1598
    %1642 = vadd.xlane.f32.xlu0 %v1641
    %v1643 = vpop.xlane.xlu0 %1642
    %v1644 = vadd.f32 %v1599, %v1600
    %1645 = vadd.xlane.f32.xlu0 %v1644
    %v1646 = vpop.xlane.xlu0 %1645
    %v1647 = vadd.f32 %v1601, %v1602
    %1648 = vadd.xlane.f32.xlu0 %v1647
    %v1649 = vpop.xlane.xlu0 %1648
    %v1650 = vadd.f32 %v1603, %v1604
    %1651 = vadd.xlane.f32.xlu0 %v1650
    %v1652 = vpop.xlane.xlu0 %1651
    %v1653 = vrcp.pop 256.0
    %v1654 = vmul.f32 %v1607, %v1653
    %v1655 = vmul.f32 %v1610, %v1653
    %v1656 = vmul.f32 %v1613, %v1653
    %v1657 = vmul.f32 %v1616, %v1653
    %v1658 = vmul.f32 %v1619, %v1653
    %v1659 = vmul.f32 %v1622, %v1653
    %v1660 = vmul.f32 %v1625, %v1653
    %v1661 = vmul.f32 %v1628, %v1653
    %v1662 = vmul.f32 %v1631, %v1653
    %v1663 = vmul.f32 %v1634, %v1653
    %v1664 = vmul.f32 %v1637, %v1653
    %v1665 = vmul.f32 %v1640, %v1653
    %v1666 = vmul.f32 %v1643, %v1653
    %v1667 = vmul.f32 %v1646, %v1653
    %v1668 = vmul.f32 %v1649, %v1653
    %v1669 = vmul.f32 %v1652, %v1653
    %v1670 = vsub.f32 %v1573, %v1654
    %v1671 = vsub.f32 %v1574, %v1654
    %v1672 = vsub.f32 %v1575, %v1655
    %v1673 = vsub.f32 %v1576, %v1655
    %v1674 = vsub.f32 %v1577, %v1656
    %v1675 = vsub.f32 %v1578, %v1656
    %v1676 = vsub.f32 %v1579, %v1657
    %v1677 = vsub.f32 %v1580, %v1657
    %v1678 = vsub.f32 %v1581, %v1658
    %v1679 = vsub.f32 %v1582, %v1658
    %v1680 = vsub.f32 %v1583, %v1659
    %v1681 = vsub.f32 %v1584, %v1659
    %v1682 = vsub.f32 %v1585, %v1660
    %v1683 = vsub.f32 %v1586, %v1660
    %v1684 = vsub.f32 %v1587, %v1661
    %v1685 = vsub.f32 %v1588, %v1661
    %v1686 = vsub.f32 %v1589, %v1662
    %v1687 = vsub.f32 %v1590, %v1662
    %v1688 = vsub.f32 %v1591, %v1663
    %v1689 = vsub.f32 %v1592, %v1663
    %v1690 = vsub.f32 %v1593, %v1664
    %v1691 = vsub.f32 %v1594, %v1664
    %v1692 = vsub.f32 %v1595, %v1665
    %v1693 = vsub.f32 %v1596, %v1665
    %v1694 = vsub.f32 %v1597, %v1666
    %v1695 = vsub.f32 %v1598, %v1666
    %v1696 = vsub.f32 %v1599, %v1667
    %v1697 = vsub.f32 %v1600, %v1667
    %v1698 = vsub.f32 %v1601, %v1668
    %v1699 = vsub.f32 %v1602, %v1668
    %v1700 = vsub.f32 %v1603, %v1669
    %v1701 = vsub.f32 %v1604, %v1669
    %v1702 = vmul.f32 %v1670, %v1670
    %v1703 = vmul.f32 %v1671, %v1671
    %v1704 = vmul.f32 %v1672, %v1672
    %v1705 = vmul.f32 %v1673, %v1673
    %v1706 = vmul.f32 %v1674, %v1674
    %v1707 = vmul.f32 %v1675, %v1675
    %v1708 = vmul.f32 %v1676, %v1676
    %v1709 = vmul.f32 %v1677, %v1677
    %v1710 = vmul.f32 %v1678, %v1678
    %v1711 = vmul.f32 %v1679, %v1679
    %v1712 = vmul.f32 %v1680, %v1680
    %v1713 = vmul.f32 %v1681, %v1681
    %v1714 = vmul.f32 %v1682, %v1682
    %v1715 = vmul.f32 %v1683, %v1683
    %v1716 = vmul.f32 %v1684, %v1684
    %v1717 = vmul.f32 %v1685, %v1685
    %v1718 = vmul.f32 %v1686, %v1686
    %v1719 = vmul.f32 %v1687, %v1687
    %v1720 = vmul.f32 %v1688, %v1688
    %v1721 = vmul.f32 %v1689, %v1689
    %v1722 = vmul.f32 %v1690, %v1690
    %v1723 = vmul.f32 %v1691, %v1691
    %v1724 = vmul.f32 %v1692, %v1692
    %v1725 = vmul.f32 %v1693, %v1693
    %v1726 = vmul.f32 %v1694, %v1694
    %v1727 = vmul.f32 %v1695, %v1695
    %v1728 = vmul.f32 %v1696, %v1696
    %v1729 = vmul.f32 %v1697, %v1697
    %v1730 = vmul.f32 %v1698, %v1698
    %v1731 = vmul.f32 %v1699, %v1699
    %v1732 = vmul.f32 %v1700, %v1700
    %v1733 = vmul.f32 %v1701, %v1701
    %v1734 = vadd.f32 %v1702, %v1703
    %1735 = vadd.xlane.f32.xlu0 %v1734
    %v1736 = vpop.xlane.xlu0 %1735
    %v1737 = vadd.f32 %v1704, %v1705
    %1738 = vadd.xlane.f32.xlu0 %v1737
    %v1739 = vpop.xlane.xlu0 %1738
    %v1740 = vadd.f32 %v1706, %v1707
    %1741 = vadd.xlane.f32.xlu0 %v1740
    %v1742 = vpop.xlane.xlu0 %1741
    %v1743 = vadd.f32 %v1708, %v1709
    %1744 = vadd.xlane.f32.xlu0 %v1743
    %v1745 = vpop.xlane.xlu0 %1744
    %v1746 = vadd.f32 %v1710, %v1711
    %1747 = vadd.xlane.f32.xlu0 %v1746
    %v1748 = vpop.xlane.xlu0 %1747
    %v1749 = vadd.f32 %v1712, %v1713
    %1750 = vadd.xlane.f32.xlu0 %v1749
    %v1751 = vpop.xlane.xlu0 %1750
    %v1752 = vadd.f32 %v1714, %v1715
    %1753 = vadd.xlane.f32.xlu0 %v1752
    %v1754 = vpop.xlane.xlu0 %1753
    %v1755 = vadd.f32 %v1716, %v1717
    %1756 = vadd.xlane.f32.xlu0 %v1755
    %v1757 = vpop.xlane.xlu0 %1756
    %v1758 = vadd.f32 %v1718, %v1719
    %1759 = vadd.xlane.f32.xlu0 %v1758
    %v1760 = vpop.xlane.xlu0 %1759
    %v1761 = vadd.f32 %v1720, %v1721
    %1762 = vadd.xlane.f32.xlu0 %v1761
    %v1763 = vpop.xlane.xlu0 %1762
    %v1764 = vadd.f32 %v1722, %v1723
    %1765 = vadd.xlane.f32.xlu0 %v1764
    %v1766 = vpop.xlane.xlu0 %1765
    %v1767 = vadd.f32 %v1724, %v1725
    %1768 = vadd.xlane.f32.xlu0 %v1767
    %v1769 = vpop.xlane.xlu0 %1768
    %v1770 = vadd.f32 %v1726, %v1727
    %1771 = vadd.xlane.f32.xlu0 %v1770
    %v1772 = vpop.xlane.xlu0 %1771
    %v1773 = vadd.f32 %v1728, %v1729
    %1774 = vadd.xlane.f32.xlu0 %v1773
    %v1775 = vpop.xlane.xlu0 %1774
    %v1776 = vadd.f32 %v1730, %v1731
    %1777 = vadd.xlane.f32.xlu0 %v1776
    %v1778 = vpop.xlane.xlu0 %1777
    %v1779 = vadd.f32 %v1732, %v1733
    %1780 = vadd.xlane.f32.xlu0 %v1779
    %v1781 = vpop.xlane.xlu0 %1780
    %v1782 = vmul.f32 %v1736, %v1653
    %v1783 = vmul.f32 %v1739, %v1653
    %v1784 = vmul.f32 %v1742, %v1653
    %v1785 = vmul.f32 %v1745, %v1653
    %v1786 = vmul.f32 %v1748, %v1653
    %v1787 = vmul.f32 %v1751, %v1653
    %v1788 = vmul.f32 %v1754, %v1653
    %v1789 = vmul.f32 %v1757, %v1653
    %v1790 = vmul.f32 %v1760, %v1653
    %v1791 = vmul.f32 %v1763, %v1653
    %v1792 = vmul.f32 %v1766, %v1653
    %v1793 = vmul.f32 %v1769, %v1653
    %v1794 = vmul.f32 %v1772, %v1653
    %v1795 = vmul.f32 %v1775, %v1653
    %v1796 = vmul.f32 %v1778, %v1653
    %v1797 = vmul.f32 %v1781, %v1653
    %v1798 = vadd.f32 %v1782, 1e-05
    %v1799 = vadd.f32 %v1783, 1e-05
    %v1800 = vadd.f32 %v1784, 1e-05
    %v1801 = vadd.f32 %v1785, 1e-05
    %v1802 = vadd.f32 %v1786, 1e-05
    %v1803 = vadd.f32 %v1787, 1e-05
    %v1804 = vadd.f32 %v1788, 1e-05
    %v1805 = vadd.f32 %v1789, 1e-05
    %v1806 = vadd.f32 %v1790, 1e-05
    %v1807 = vadd.f32 %v1791, 1e-05
    %v1808 = vadd.f32 %v1792, 1e-05
    %v1809 = vadd.f32 %v1793, 1e-05
    %v1810 = vadd.f32 %v1794, 1e-05
    %v1811 = vadd.f32 %v1795, 1e-05
    %v1812 = vadd.f32 %v1796, 1e-05
    %v1813 = vadd.f32 %v1797, 1e-05
    %v1814 = vrsqrt.pop %v1798
    %v1815 = vrsqrt.pop %v1799
    %v1816 = vrsqrt.pop %v1800
    %v1817 = vrsqrt.pop %v1801
    %v1818 = vrsqrt.pop %v1802
    %v1819 = vrsqrt.pop %v1803
    %v1820 = vrsqrt.pop %v1804
    %v1821 = vrsqrt.pop %v1805
    %v1822 = vrsqrt.pop %v1806
    %v1823 = vrsqrt.pop %v1807
    %v1824 = vrsqrt.pop %v1808
    %v1825 = vrsqrt.pop %v1809
    %v1826 = vrsqrt.pop %v1810
    %v1827 = vrsqrt.pop %v1811
    %v1828 = vrsqrt.pop %v1812
    %v1829 = vrsqrt.pop %v1813
    %v1830 = vmul.f32 %v1670, %v1814
    %v1831 = vmul.f32 %v1671, %v1814
    %v1832 = vmul.f32 %v1672, %v1815
    %v1833 = vmul.f32 %v1673, %v1815
    %v1834 = vmul.f32 %v1674, %v1816
    %v1835 = vmul.f32 %v1675, %v1816
    %v1836 = vmul.f32 %v1676, %v1817
    %v1837 = vmul.f32 %v1677, %v1817
    %v1838 = vmul.f32 %v1678, %v1818
    %v1839 = vmul.f32 %v1679, %v1818
    %v1840 = vmul.f32 %v1680, %v1819
    %v1841 = vmul.f32 %v1681, %v1819
    %v1842 = vmul.f32 %v1682, %v1820
    %v1843 = vmul.f32 %v1683, %v1820
    %v1844 = vmul.f32 %v1684, %v1821
    %v1845 = vmul.f32 %v1685, %v1821
    %v1846 = vmul.f32 %v1686, %v1822
    %v1847 = vmul.f32 %v1687, %v1822
    %v1848 = vmul.f32 %v1688, %v1823
    %v1849 = vmul.f32 %v1689, %v1823
    %v1850 = vmul.f32 %v1690, %v1824
    %v1851 = vmul.f32 %v1691, %v1824
    %v1852 = vmul.f32 %v1692, %v1825
    %v1853 = vmul.f32 %v1693, %v1825
    %v1854 = vmul.f32 %v1694, %v1826
    %v1855 = vmul.f32 %v1695, %v1826
    %v1856 = vmul.f32 %v1696, %v1827
    %v1857 = vmul.f32 %v1697, %v1827
    %v1858 = vmul.f32 %v1698, %v1828
    %v1859 = vmul.f32 %v1699, %v1828
    %v1860 = vmul.f32 %v1700, %v1829
    %v1861 = vmul.f32 %v1701, %v1829
    %v1862 = vpack.c.bf16 %v1832, %v1830
    %v1863 = vpack.c.bf16 %v1833, %v1831
    %v1864 = vpack.c.bf16 %v1836, %v1834
    %v1865 = vpack.c.bf16 %v1837, %v1835
    %v1866 = vpack.c.bf16 %v1840, %v1838
    %v1867 = vpack.c.bf16 %v1841, %v1839
    %v1868 = vpack.c.bf16 %v1844, %v1842
    %v1869 = vpack.c.bf16 %v1845, %v1843
    %v1870 = vpack.c.bf16 %v1848, %v1846
    %v1871 = vpack.c.bf16 %v1849, %v1847
    %v1872 = vpack.c.bf16 %v1852, %v1850
    %v1873 = vpack.c.bf16 %v1853, %v1851
    %v1874 = vpack.c.bf16 %v1856, %v1854
    %v1875 = vpack.c.bf16 %v1857, %v1855
    %v1876 = vpack.c.bf16 %v1860, %v1858
    %v1877 = vpack.c.bf16 %v1861, %v1859
    %v1878 = vld [vmem:[%s0] sm:$0xf]
    %v1879 = vld [vmem:[%s0 + $0x4] sm:$0xf]
    %v1880 = vld [vmem:[%s0 + $0x8] sm:$0xf]
    %v1881 = vld [vmem:[%s0 + $0xc] sm:$0xf]
    %v1882 = vld [vmem:[%s0 + $0x10] sm:$0xf]
    %v1883 = vld [vmem:[%s0 + $0x14] sm:$0xf]
    %v1884 = vld [vmem:[%s0 + $0x18] sm:$0xf]
    %v1885 = vld [vmem:[%s0 + $0x1c] sm:$0xf]
    %v1886 = vld [vmem:[%s0 + $0x20] sm:$0xf]
    %v1887 = vld [vmem:[%s0 + $0x24] sm:$0xf]
    %v1888 = vld [vmem:[%s0 + $0x28] sm:$0xf]
    %v1889 = vld [vmem:[%s0 + $0x2c] sm:$0xf]
    %v1890 = vld [vmem:[%s0 + $0x30] sm:$0xf]
    %v1891 = vld [vmem:[%s0 + $0x34] sm:$0xf]
    %v1892 = vld [vmem:[%s0 + $0x38] sm:$0xf]
    %v1893 = vld [vmem:[%s0 + $0x3c] sm:$0xf]
    %v1894 = vld [vmem:[%s0 + $0x40] sm:$0xf]
    %v1895 = vld [vmem:[%s0 + $0x44] sm:$0xf]
    %v1896 = vld [vmem:[%s0 + $0x48] sm:$0xf]
    %v1897 = vld [vmem:[%s0 + $0x4c] sm:$0xf]
    %v1898 = vld [vmem:[%s0 + $0x50] sm:$0xf]
    %v1899 = vld [vmem:[%s0 + $0x54] sm:$0xf]
    %v1900 = vld [vmem:[%s0 + $0x58] sm:$0xf]
    %v1901 = vld [vmem:[%s0 + $0x5c] sm:$0xf]
    %v1902 = vld [vmem:[%s0 + $0x60] sm:$0xf]
    %v1903 = vld [vmem:[%s0 + $0x64] sm:$0xf]
    %v1904 = vld [vmem:[%s0 + $0x68] sm:$0xf]
    %v1905 = vld [vmem:[%s0 + $0x6c] sm:$0xf]
    %v1906 = vld [vmem:[%s0 + $0x70] sm:$0xf]
    %v1907 = vld [vmem:[%s0 + $0x74] sm:$0xf]
    %v1908 = vld [vmem:[%s0 + $0x78] sm:$0xf]
    %v1909 = vld [vmem:[%s0 + $0x7c] sm:$0xf]
    %v1910 = vld [vmem:[%s1] sm:$0x1]
    %v1912 = vlaneseq
    %v1913 = vshrl.u32 %v1912, 7
    %v1914 = vsub.s32 0, %v1913
    %v1915 = vrot.slane %v1910, %v1914
    %v1949 = vunpack.c.l.b16 %v1878
    %v1950 = vunpack.c.l.b16 %v1879
    %v1951 = vunpack.c.l.b16 %v1880
    %v1952 = vunpack.c.l.b16 %v1881
    %v1953 = vunpack.c.l.b16 %v1882
    %v1954 = vunpack.c.l.b16 %v1883
    %v1955 = vunpack.c.l.b16 %v1884
    %v1956 = vunpack.c.l.b16 %v1885
    %v1957 = vunpack.c.l.b16 %v1886
    %v1958 = vunpack.c.l.b16 %v1887
    %v1959 = vunpack.c.l.b16 %v1888
    %v1960 = vunpack.c.l.b16 %v1889
    %v1961 = vunpack.c.l.b16 %v1890
    %v1962 = vunpack.c.l.b16 %v1891
    %v1963 = vunpack.c.l.b16 %v1892
    %v1964 = vunpack.c.l.b16 %v1893
    %v1965 = vunpack.c.l.b16 %v1894
    %v1966 = vunpack.c.l.b16 %v1895
    %v1967 = vunpack.c.l.b16 %v1896
    %v1968 = vunpack.c.l.b16 %v1897
    %v1969 = vunpack.c.l.b16 %v1898
    %v1970 = vunpack.c.l.b16 %v1899
    %v1971 = vunpack.c.l.b16 %v1900
    %v1972 = vunpack.c.l.b16 %v1901
    %v1973 = vunpack.c.l.b16 %v1902
    %v1974 = vunpack.c.l.b16 %v1903
    %v1975 = vunpack.c.l.b16 %v1904
    %v1976 = vunpack.c.l.b16 %v1905
    %v1977 = vunpack.c.l.b16 %v1906
    %v1978 = vunpack.c.l.b16 %v1907
    %v1979 = vunpack.c.l.b16 %v1908
    %v1980 = vunpack.c.l.b16 %v1909
    %v1981 = vpack.c.b16 %v1950, %v1949
    %v1982 = vpack.c.b16 %v1952, %v1951
    %v1983 = vpack.c.b16 %v1954, %v1953
    %v1984 = vpack.c.b16 %v1956, %v1955
    %v1985 = vpack.c.b16 %v1958, %v1957
    %v1986 = vpack.c.b16 %v1960, %v1959
    %v1987 = vpack.c.b16 %v1962, %v1961
    %v1988 = vpack.c.b16 %v1964, %v1963
    %v1989 = vpack.c.b16 %v1966, %v1965
    %v1990 = vpack.c.b16 %v1968, %v1967
    %v1991 = vpack.c.b16 %v1970, %v1969
    %v1992 = vpack.c.b16 %v1972, %v1971
    %v1993 = vpack.c.b16 %v1974, %v1973
    %v1994 = vpack.c.b16 %v1976, %v1975
    %v1995 = vpack.c.b16 %v1978, %v1977
    %v1996 = vpack.c.b16 %v1980, %v1979
    %2013 = vmatprep.subr.bf16.mxu0 0
    %2014 = vmatpush1.bf16.msra.mxu0 %v1988
    %2015 = vmatprep.subr.bf16.mxu0 0
    %2016 = vmatpush1.bf16.msra.mxu0 %v1987
    %2017 = vmatprep.subr.bf16.mxu0 0
    %2018 = vmatpush1.bf16.msra.mxu0 %v1986
    %2019 = vmatprep.subr.bf16.mxu0 0
    %2020 = vmatpush1.bf16.msra.mxu0 %v1985
    %2021 = vmatprep.subr.bf16.mxu0 0
    %2022 = vmatpush1.bf16.msra.mxu0 %v1984
    %2023 = vmatprep.subr.bf16.mxu0 0
    %2024 = vmatpush1.bf16.msra.mxu0 %v1983
    %2025 = vmatprep.subr.bf16.mxu0 0
    %2026 = vmatpush1.bf16.msra.mxu0 %v1982
    %2027 = vmatprep.subr.bf16.mxu0 0
    %2028 = vmatpush1.bf16.msra.mxu0 %v1981
    %2029 = vmatprep.subr.bf16.mxu0 0
    %2030 = vmatpush2.bf16.msra.mxu0 %v1996
    %2031 = vmatprep.subr.bf16.mxu0 0
    %2032 = vmatpush2.bf16.msra.mxu0 %v1995
    %2033 = vmatprep.subr.bf16.mxu0 0
    %2034 = vmatpush2.bf16.msra.mxu0 %v1994
    %2035 = vmatprep.subr.bf16.mxu0 0
    %2036 = vmatpush2.bf16.msra.mxu0 %v1993
    %2037 = vmatprep.subr.bf16.mxu0 0
    %2038 = vmatpush2.bf16.msra.mxu0 %v1992
    %2039 = vmatprep.subr.bf16.mxu0 0
    %2040 = vmatpush2.bf16.msra.mxu0 %v1991
    %2041 = vmatprep.subr.bf16.mxu0 0
    %2042 = vmatpush2.bf16.msra.mxu0 %v1990
    %2043 = vmatprep.subr.bf16.mxu0 0
    %2044 = vmatpush2.bf16.msra.mxu0 %v1989
    %2045 = vmatprep.mubr.bf16.mxu0 %v1863
    %2046 = vmatmul.mubr.bf16.gmra.mxu0 %v1862
    %v2047 = vpop.f32.mrf.mxu0
    %v2048 = vadd.f32 %v1915, %v2047
    %v2049 = vpop.f32.mrf.mxu0
    %v2050 = vpop.f32.mrf.mxu0
    %v2051 = vadd.f32 %v1915, %v2050
    %v2052 = vpop.f32.mrf.mxu0
    %2053 = vmatprep.mubr.bf16.mxu0 %v1865
    %2054 = vmatmul.mubr.bf16.gmra.mxu0 %v1864
    %v2055 = vpop.f32.mrf.mxu0
    %v2056 = vadd.f32 %v1915, %v2055
    %v2057 = vpop.f32.mrf.mxu0
    %v2058 = vpop.f32.mrf.mxu0
    %v2059 = vadd.f32 %v1915, %v2058
    %v2060 = vpop.f32.mrf.mxu0
    %2061 = vmatprep.mubr.bf16.mxu0 %v1867
    %2062 = vmatmul.mubr.bf16.gmra.mxu0 %v1866
    %v2063 = vpop.f32.mrf.mxu0
    %v2064 = vadd.f32 %v1915, %v2063
    %v2065 = vpop.f32.mrf.mxu0
    %v2066 = vpop.f32.mrf.mxu0
    %v2067 = vadd.f32 %v1915, %v2066
    %v2068 = vpop.f32.mrf.mxu0
    %2069 = vmatprep.mubr.bf16.mxu0 %v1869
    %2070 = vmatmul.mubr.bf16.gmra.mxu0 %v1868
    %v2071 = vpop.f32.mrf.mxu0
    %v2072 = vadd.f32 %v1915, %v2071
    %v2073 = vpop.f32.mrf.mxu0
    %v2074 = vpop.f32.mrf.mxu0
    %v2075 = vadd.f32 %v1915, %v2074
    %v2076 = vpop.f32.mrf.mxu0
    %2077 = vmatprep.mubr.bf16.mxu0 %v1871
    %2078 = vmatmul.mubr.bf16.gmra.mxu0 %v1870
    %v2079 = vpop.f32.mrf.mxu0
    %v2080 = vadd.f32 %v1915, %v2079
    %v2081 = vpop.f32.mrf.mxu0
    %v2082 = vpop.f32.mrf.mxu0
    %v2083 = vadd.f32 %v1915, %v2082
    %v2084 = vpop.f32.mrf.mxu0
    %2085 = vmatprep.mubr.bf16.mxu0 %v1873
    %2086 = vmatmul.mubr.bf16.gmra.mxu0 %v1872
    %v2087 = vpop.f32.mrf.mxu0
    %v2088 = vadd.f32 %v1915, %v2087
    %v2089 = vpop.f32.mrf.mxu0
    %v2090 = vpop.f32.mrf.mxu0
    %v2091 = vadd.f32 %v1915, %v2090
    %v2092 = vpop.f32.mrf.mxu0
    %2093 = vmatprep.mubr.bf16.mxu0 %v1875
    %2094 = vmatmul.mubr.bf16.gmra.mxu0 %v1874
    %v2095 = vpop.f32.mrf.mxu0
    %v2096 = vadd.f32 %v1915, %v2095
    %v2097 = vpop.f32.mrf.mxu0
    %v2098 = vpop.f32.mrf.mxu0
    %v2099 = vadd.f32 %v1915, %v2098
    %v2100 = vpop.f32.mrf.mxu0
    %2101 = vmatprep.mubr.bf16.mxu0 %v1877
    %2102 = vmatmul.mubr.bf16.gmra.mxu0 %v1876
    %v2103 = vpop.f32.mrf.mxu0
    %v2104 = vadd.f32 %v1915, %v2103
    %v2105 = vpop.f32.mrf.mxu0
    %v2106 = vpop.f32.mrf.mxu0
    %v2107 = vadd.f32 %v1915, %v2106
    %v2108 = vpop.f32.mrf.mxu0
    %2109 = vdwg.mxu0
    %2110 = vst [vmem:[#allocation22] sm:$0xff] %v2048
    %2111 = vst [vmem:[#allocation22 + $0x8] sm:$0xff] %v2051
    %2112 = vst [vmem:[#allocation22 + $0x10] sm:$0xff] %v2056
    %2113 = vst [vmem:[#allocation22 + $0x18] sm:$0xff] %v2059
    %2114 = vst [vmem:[#allocation22 + $0x20] sm:$0xff] %v2064
    %2115 = vst [vmem:[#allocation22 + $0x28] sm:$0xff] %v2067
    %2116 = vst [vmem:[#allocation22 + $0x30] sm:$0xff] %v2072
    %2117 = vst [vmem:[#allocation22 + $0x38] sm:$0xff] %v2075
    %2118 = vst [vmem:[#allocation22 + $0x40] sm:$0xff] %v2080
    %2119 = vst [vmem:[#allocation22 + $0x48] sm:$0xff] %v2083
    %2120 = vst [vmem:[#allocation22 + $0x50] sm:$0xff] %v2088
    %2121 = vst [vmem:[#allocation22 + $0x58] sm:$0xff] %v2091
    %2122 = vst [vmem:[#allocation22 + $0x60] sm:$0xff] %v2096
    %2123 = vst [vmem:[#allocation22 + $0x68] sm:$0xff] %v2099
    %2124 = vst [vmem:[#allocation22 + $0x70] sm:$0xff] %v2104
    %2125 = vst [vmem:[#allocation22 + $0x78] sm:$0xff] %v2107
    // Predicated region
    $region26: #{down_forward.2} parent=1 // pred_check
      _
    $region27: #{down_forward.2} parent=1 // pred_check_branch
      %2127 = sbr.rel (0) target = $region29
    $region28: #{down_forward.2} parent=1 // pred_region
      %s2129 = ssub.s32 2048, 2048
      %2130 = vsyncadd [#allocation23], %s2129
      %s2131 = sshll.u32 [#allocation22], 4
      %s2132 = int_to_ptr.vmem [resolvable:$true] %s2131
      %2137 = dma.vmem_to_hbm [thread:$0]  %s2132, 2048, %s7, [#allocation23], 128, 128, 8
    $region29: #{down_forward.2} parent=1 // pred_fallthru
      _
    // Predicated region
    $region30: #{down_forward.2} parent=1 // pred_check
      _
    $region31: #{down_forward.2} parent=1 // pred_check_branch
      %2139 = sbr.rel (0) target = $region33
    $region32: #{down_forward.2} parent=1 // pred_region
      %2140 = dma.done [#allocation23], 2048
    $region33: #{down_forward.2} parent=1 // pred_fallthru
      _
    %2141 = vsyncpa [#allocation23], 1

</llo_original>
